<compile_context>
chip_gen: v6e
topology: v6e:2x2x1
jax: 0.10.0
libtpu: 0.0.40
codegen_flags: <defaults>
</compile_context>

<pallas_src>
import functools

import jax
import jax.numpy as jnp
from jax import lax
from jax.experimental import pallas as pl
from jax.experimental.pallas import tpu as pltpu

EPS = 1e-6                      # nn.LayerNorm(dim, 1e-06)
LANE = 128                      # TPU lane width; feature dims padded to this
MAX_ROW_TILE = 1024             # row-tile cap for the fused depth stack
MATMUL_DTYPE = jnp.bfloat16     # matmul operand dtype (f32 accumulation kept);
                                # flip to jnp.float32 for bit-exact f32 math
USE_TANH_GELU = False           # True -> tanh-approx GELU on the EUP slot
                                # (small numeric deviation from exact erf)
VMEM_HEADROOM = 1.4             # footprint -> vmem_limit headroom factor


def _round_up(x, m):
    return ((x + m - 1) // m) * m


@functools.lru_cache(maxsize=None)
def _vmem_budget_bytes():
    """~85% of per-core physical VMEM, capped at 112 MiB; conservative 64 MiB
    fallback (v7x TensorCore) if the query is unavailable."""
    phys = 64 * 1024 * 1024
    try:
        phys = int(pltpu.get_tpu_info().vmem_capacity_bytes)
    except Exception:
        pass
    return max(min(int(phys * 0.85), 112 * 1024 * 1024), 32 * 1024 * 1024)


def _blocks_vmem_bytes(tile_rows, d_pad, h_pad):
    """Rough VMEM footprint of one blocks-kernel grid step."""
    wbytes = jax.dtypes.canonicalize_dtype(MATMUL_DTYPE).itemsize
    per_layer_w = ((d_pad * d_pad + 2 * d_pad * h_pad) * wbytes   # proj/fc1/fc2
                   + (6 * d_pad + h_pad) * 4)                     # LN params + biases
    io_tiles = 2 * 2 * tile_rows * d_pad * 4      # x-in + out, double-buffered, f32
    hidden = tile_rows * h_pad * 4                # fc1 / GELU intermediate (f32)
    casts = tile_rows * (d_pad + h_pad) * wbytes  # bf16 operand copies
    return 2 * per_layer_w + io_tiles + hidden + casts


def _pick_blocks_tiling(rows, d_pad, h_pad, budget):
    """Largest row tile (fewest weight re-streams) whose footprint fits VMEM.
    Returns (tile_rows, vmem_limit_bytes)."""
    rows8 = _round_up(max(rows, 8), 8)
    nsteps = -(-rows8 // MAX_ROW_TILE)
    while True:
        tile = _round_up(-(-rows8 // nsteps), 8)
        need = int(_blocks_vmem_bytes(tile, d_pad, h_pad) * VMEM_HEADROOM)
        if need <= budget or tile <= 8:
            vmem_limit = int(min(budget, max(need, 24 * 1024 * 1024)))
            return tile, vmem_limit
        nsteps += 1
    # TODO(synk): for ViT-L/H on v7x (64 MiB VMEM/TC) even tile=8 may not fit:
    # add an innermost "arbitrary" hidden-dim chunking axis for w_fc1/w_fc2.


def _pick_linear_tile(rows):
    return min(512, _round_up(max(rows, 8), 8))


# ---------------------------------------------------------------------------
# in-kernel helpers
# ---------------------------------------------------------------------------
def _layernorm(x, g, b, mask, d_real):
    """LayerNorm over the last dim, which may be zero-padded from d_real up to a
    multiple of 128.  `mask` is a resident (1, d_pad) f32 lane mask (1 on real
    lanes, 0 on pads); padded lanes of x/g/b are exact zeros by construction."""
    d_pad = x.shape[-1]
    inv_d = 1.0 / d_real
    mu = jnp.sum(x, axis=-1, keepdims=True) * inv_d          # pads are zero
    diff = x - mu
    if d_real != d_pad:
        diff = diff * mask                                   # zero padded lanes
    var = jnp.sum(diff * diff, axis=-1, keepdims=True) * inv_d
    # padded lanes: diff = 0 and gamma/beta pads = 0 -> output pads stay 0
    return diff * lax.rsqrt(var + EPS) * g + b


def _gelu(x):
    if USE_TANH_GELU:
        c = 0.7978845608028654   # sqrt(2/pi)
        return 0.5 * x * (1.0 + jnp.tanh(c * (x + 0.044715 * x * x * x)))
    # nn.GELU() default = exact erf formulation (kept for faithfulness).
    return 0.5 * x * (1.0 + lax.erf(x * 0.7071067811865476))


# ---------------------------------------------------------------------------
# kernel 1: plain linear  y = x @ W + b   (patch embedding)
# ---------------------------------------------------------------------------
def _linear_kernel(x_ref, w_ref, b_ref, o_ref):
    x = x_ref[...].astype(w_ref.dtype)          # operand cast folded in-kernel
    y = jnp.dot(x, w_ref[...], preferred_element_type=jnp.float32)
    o_ref[...] = (y + b_ref[...]).astype(o_ref.dtype)


def linear_pallas(x, w, b, tile_rows, vmem_limit):
    R, K = x.shape
    N = w.shape[1]
    r_pad = _round_up(R, tile_rows)
    if r_pad != R:
        x = jnp.pad(x, ((0, r_pad - R), (0, 0)))
    out = pl.pallas_call(
        _linear_kernel,
        out_shape=jax.ShapeDtypeStruct((r_pad, N), jnp.float32),
        grid=(r_pad // tile_rows,),
        in_specs=[
            pl.BlockSpec((tile_rows, K), lambda i: (i, 0)),
            pl.BlockSpec((K, N), lambda i: (0, 0)),   # weight resident (const idx)
            pl.BlockSpec((1, N), lambda i: (0, 0)),
        ],
        out_specs=pl.BlockSpec((tile_rows, N), lambda i: (i, 0)),
        compiler_params=pltpu.CompilerParams(
            dimension_semantics=("parallel",),
            vmem_limit_bytes=vmem_limit),
    )(x, w, b)
    return out[:R]


# ---------------------------------------------------------------------------
# kernel 2: the FULL transformer stack, fused over depth.
#   grid = (row_tiles [parallel], depth [arbitrary])
#   The output block index is constant along the depth axis, so o_ref is the
#   VMEM-resident working activation buffer for the entire stack (no scratch,
#   no HBM activation round-trips between layers).  Per-layer weights are
#   indexed by the inner grid axis (double-buffered => next layer's weights
#   prefetch while the current layer computes).
#
#   Per layer (reference semantics):
#     x = x + proj(LN1(x))                 <- attention's qkv output discarded
#     x = x + fc2(gelu(fc1(LN2(x))))
# ---------------------------------------------------------------------------
def _blocks_kernel(x_ref, mask_ref,
                   g1_ref, b1_ref, wp_ref, bp_ref,
                   g2_ref, b2_ref, w1_ref, bb1_ref, w2_ref, bb2_ref,
                   o_ref, *, d_real):
    l = pl.program_id(1)

    @pl.when(l == 0)
    def _():                                       # tile becomes resident in o_ref
        o_ref[...] = x_ref[...].astype(jnp.float32)

    x = o_ref[...]
    mask = mask_ref[...]

    # "attention" sub-block (reference bug: output is just proj(norm1(x)))
    h = _layernorm(x, g1_ref[0], b1_ref[0], mask, d_real)
    attn = jnp.dot(h.astype(wp_ref.dtype), wp_ref[0],
                   preferred_element_type=jnp.float32) + bp_ref[0]
    x = x + attn

    # MLP sub-block (f32 elementwise, bf16 matmul operands, f32 accumulation)
    h2 = _layernorm(x, g2_ref[0], b2_ref[0], mask, d_real)
    z = jnp.dot(h2.astype(w1_ref.dtype), w1_ref[0],
                preferred_element_type=jnp.float32) + bb1_ref[0]
    z = _gelu(z)
    z = jnp.dot(z.astype(w2_ref.dtype), w2_ref[0],
                preferred_element_type=jnp.float32) + bb2_ref[0]
    o_ref[...] = x + z            # written back to HBM only after the last layer


def blocks_pallas(x_rows, lane_mask, params, d_real, tile_rows, vmem_limit):
    r_pad, d_pad = x_rows.shape
    weight_names = ["blk_ln1_g", "blk_ln1_b", "blk_w_proj", "blk_b_proj",
                    "blk_ln2_g", "blk_ln2_b", "blk_w_fc1", "blk_b_fc1",
                    "blk_w_fc2", "blk_b_fc2"]
    weights = [params[k] for k in weight_names]
    depth = weights[2].shape[0]

    def wspec(shape):
        return pl.BlockSpec((1,) + shape[1:], lambda i, l: (l, 0, 0))

    kernel = functools.partial(_blocks_kernel, d_real=d_real)
    return pl.pallas_call(
        kernel,
        out_shape=jax.ShapeDtypeStruct((r_pad, d_pad), jnp.float32),
        grid=(r_pad // tile_rows, depth),
        in_specs=[pl.BlockSpec((tile_rows, d_pad), lambda i, l: (i, 0)),
                  pl.BlockSpec((1, d_pad), lambda i, l: (0, 0))]
                 + [wspec(w.shape) for w in weights],
        out_specs=pl.BlockSpec((tile_rows, d_pad), lambda i, l: (i, 0)),
        compiler_params=pltpu.CompilerParams(
            dimension_semantics=("parallel", "arbitrary"),
            vmem_limit_bytes=vmem_limit),
    )(x_rows, lane_mask, *weights)


# ---------------------------------------------------------------------------
# kernel 3: final LayerNorm on cls tokens + classification head
# (classes padded to 128 lanes; wrapper slices back to n_classes)
# ---------------------------------------------------------------------------
def _head_kernel(x_ref, mask_ref, g_ref, b_ref, w_ref, bb_ref, o_ref, *, d_real):
    h = _layernorm(x_ref[...].astype(jnp.float32), g_ref[...], b_ref[...],
                   mask_ref[...], d_real)
    y = jnp.dot(h.astype(w_ref.dtype), w_ref[...],
                preferred_element_type=jnp.float32) + bb_ref[...]
    o_ref[...] = y.astype(o_ref.dtype)


def head_pallas(x_cls, lane_mask, norm_g, norm_b, w_head, b_head, d_real,
                vmem_limit):
    n, _ = x_cls.shape
    c_pad = w_head.shape[1]
    full = lambda a: pl.BlockSpec(a.shape, lambda i: (0, 0))
    kernel = functools.partial(_head_kernel, d_real=d_real)
    return pl.pallas_call(
        kernel,
        out_shape=jax.ShapeDtypeStruct((n, c_pad), jnp.float32),
        grid=(1,),
        in_specs=[full(x_cls), full(lane_mask), full(norm_g), full(norm_b),
                  full(w_head), full(b_head)],
        out_specs=pl.BlockSpec((n, c_pad), lambda i: (0, 0)),
        compiler_params=pltpu.CompilerParams(vmem_limit_bytes=vmem_limit),
    )(x_cls, lane_mask, norm_g, norm_b, w_head, b_head)


# ---------------------------------------------------------------------------
# full forward
# ---------------------------------------------------------------------------
def vit_forward(x_nchw, params, *, patch_size, dims):
    n, c, h, w = x_nchw.shape
    ps = patch_size
    hp, wp = h // ps, w // ps
    d, d_pad, h_pad = dims["d"], dims["d_pad"], dims["hidden_pad"]
    budget = _vmem_budget_bytes()
    small_limit = int(min(budget, 32 * 1024 * 1024))

    # PatchEmbedding: stride=kernel conv == unfold patches + linear
    k_real = c * ps * ps
    k_pad = params["pe_w"].shape[0]
    patches = (x_nchw.reshape(n, c, hp, ps, wp, ps)
                      .transpose(0, 2, 4, 1, 3, 5)
                      .reshape(n * hp * wp, k_real))
    if k_pad != k_real:
        patches = jnp.pad(patches, ((0, 0), (0, k_pad - k_real)))
    pe_tile = _pick_linear_tile(n * hp * wp)
    emb = linear_pallas(patches, params["pe_w"], params["pe_b"], pe_tile,
                        small_limit)
    emb = emb.reshape(n, hp * wp, d_pad)                        # (N, P, Dpad) f32

    # prepend cls token (pos_embed / pos_drop are unused in the reference forward)
    cls = jnp.broadcast_to(params["cls_token"], (n, 1, d_pad)).astype(jnp.float32)
    x = jnp.concatenate([cls, emb], axis=1)                     # (N, T, Dpad)

    t = hp * wp + 1
    rows = n * t
    tile_rows, blocks_limit = _pick_blocks_tiling(rows, d_pad, h_pad, budget)
    r_pad = _round_up(rows, tile_rows)
    xr = x.reshape(rows, d_pad)
    if r_pad != rows:
        # padded rows are all-zero; they stay finite through LN (EPS) and are
        # sliced off below — pure (small) waste, no correctness impact.
        xr = jnp.pad(xr, ((0, r_pad - rows), (0, 0)))

    lane_mask = (jnp.arange(d_pad) < d).astype(jnp.float32).reshape(1, d_pad)

    # whole depth stack in one fused pallas_call
    xr = blocks_pallas(xr, lane_mask, params, d, tile_rows, blocks_limit)

    xr = xr[:rows].reshape(n, t, d_pad)
    cls_final = xr[:, 0]                                        # (N, Dpad)
    logits_pad = head_pallas(cls_final, lane_mask, params["norm_g"],
                             params["norm_b"], params["head_w"],
                             params["head_b"], d, small_limit)
    return logits_pad[:, :dims["n_classes"]]


# ---------------------------------------------------------------------------
# deterministic parameter init (synthetic; mirrors the module's shapes,
# zero-padded to lane-dense feature dims; matmul weights stored in bf16)
# ---------------------------------------------------------------------------
def init_params(key, patch_size, in_chans, n_classes, embed_dim, depth, mlp_ratio):
    d = embed_dim
    hidden = int(mlp_ratio * d)
    d_pad = _round_up(d, LANE)
    h_pad = _round_up(hidden, LANE)
    c_pad = _round_up(n_classes, LANE)
    k_in = in_chans * patch_size * patch_size
    k_pad = _round_up(k_in, LANE)

    def lin(k, fan_in, fan_out, fi_pad, fo_pad):
        kw, kb = jax.random.split(k)
        w = jax.random.normal(kw, (fan_in, fan_out), jnp.float32) * 0.02
        b = jax.random.normal(kb, (1, fan_out), jnp.float32) * 0.02
        wp = jnp.zeros((fi_pad, fo_pad), jnp.float32).at[:fan_in, :fan_out].set(w)
        bp = jnp.zeros((1, fo_pad), jnp.float32).at[:, :fan_out].set(b)
        return wp.astype(MATMUL_DTYPE), bp          # bf16 weights, f32 bias

    keys = jax.random.split(key, depth + 2)
    pe_w, pe_b = lin(keys[0], k_in, d, k_pad, d_pad)

    # LayerNorm params: real lanes gamma=1/beta=0, padded lanes gamma=beta=0
    # so normalized padded lanes stay exactly zero.
    ln_g = jnp.zeros((1, d_pad), jnp.float32).at[:, :d].set(1.0)
    ln_b = jnp.zeros((1, d_pad), jnp.float32)

    g1s, b1s, wps, bps, g2s, b2s, w1s, bb1s, w2s, bb2s = ([] for _ in range(10))
    for i in range(depth):
        k1, k2, k3 = jax.random.split(keys[1 + i], 3)
        w_proj, b_proj = lin(k1, d, d, d_pad, d_pad)
        w_fc1, b_fc1 = lin(k2, d, hidden, d_pad, h_pad)
        w_fc2, b_fc2 = lin(k3, hidden, d, h_pad, d_pad)
        g1s.append(ln_g); b1s.append(ln_b)
        g2s.append(ln_g); b2s.append(ln_b)
        wps.append(w_proj); bps.append(b_proj)
        w1s.append(w_fc1); bb1s.append(b_fc1)
        w2s.append(w_fc2); bb2s.append(b_fc2)

    head_w, head_b = lin(keys[depth + 1], d, n_classes, d_pad, c_pad)

    stack = lambda xs: jnp.stack(xs, axis=0)
    params = dict(
        pe_w=pe_w, pe_b=pe_b,
        cls_token=jnp.zeros((1, 1, d_pad), jnp.float32),   # torch.zeros init
        blk_ln1_g=stack(g1s), blk_ln1_b=stack(b1s),
        blk_w_proj=stack(wps), blk_b_proj=stack(bps),
        blk_ln2_g=stack(g2s), blk_ln2_b=stack(b2s),
        blk_w_fc1=stack(w1s), blk_b_fc1=stack(bb1s),
        blk_w_fc2=stack(w2s), blk_b_fc2=stack(bb2s),
        norm_g=ln_g, norm_b=ln_b,
        head_w=head_w, head_b=head_b,
    )
    dims = dict(d=d, d_pad=d_pad, hidden=hidden, hidden_pad=h_pad,
                n_classes=n_classes, c_pad=c_pad, k_pad=k_pad)
    return params, dims


if __name__ == "__main__":
    # small shapes consistent with the module: img=16, patch=4 -> 16 patches,
    # seq=17, embed_dim=32 (padded to 128 lanes), depth=2, mlp hidden=128,
    # 16 classes (padded to 128), batch=2
    IMG, PATCH, CHANS, EMBED, DEPTH, NCLASSES = 16, 4, 3, 32, 2, 16

    key = jax.random.PRNGKey(0)
    k_params, k_x = jax.random.split(key)
    params, dims = init_params(k_params, PATCH, CHANS, NCLASSES, EMBED, DEPTH,
                               mlp_ratio=4.0)
    x = jax.random.normal(k_x, (2, CHANS, IMG, IMG), jnp.float32)

    fwd = jax.jit(functools.partial(vit_forward, patch_size=PATCH, dims=dims))
    logits = fwd(x, params)
    jax.block_until_ready(logits)
    assert logits.shape == (2, NCLASSES), logits.shape
    assert bool(jnp.all(jnp.isfinite(logits)))
    print("KERNEL_OK")
</pallas_src>

<mosaic_0001>
module attributes {stable_mosaic.version = 11 : i64} {
  func.func @_linear_kernel(%arg0: i32, %arg1: memref<32x128xf32, #tpu.memory_space<vmem>>, %arg2: memref<128x128xbf16, #tpu.memory_space<vmem>>, %arg3: memref<1x128xf32, #tpu.memory_space<vmem>>, %arg4: memref<32x128xf32, #tpu.memory_space<vmem>>) attributes {dimension_semantics = [#tpu.dimension_semantics<parallel>], iteration_bounds = array<i64: 1>, scalar_prefetch = 0 : i64, scratch_operands = 0 : i64, tpu.core_type = #tpu.core_type<tc>, window_params = [{transform_indices = @transform_0, window_bounds = array<i64: 32, 128>}, {pipeline_mode = #tpu.pipeline_mode<synchronous>, transform_indices = @transform_1, window_bounds = array<i64: 128, 128>}, {pipeline_mode = #tpu.pipeline_mode<synchronous>, transform_indices = @transform_2, window_bounds = array<i64: 1, 128>}, {transform_indices = @transform_3, window_bounds = array<i64: 32, 128>}]} {
    %c0 = arith.constant 0 : index
    %c0_0 = arith.constant 0 : index
    %0 = vector.load %arg1[%c0, %c0_0] : memref<32x128xf32, #tpu.memory_space<vmem>>, vector<32x128xf32>
    %1 = arith.truncf %0 : vector<32x128xf32> to vector<32x128xbf16>
    %c0_1 = arith.constant 0 : index
    %c0_2 = arith.constant 0 : index
    %2 = vector.load %arg2[%c0_1, %c0_2] : memref<128x128xbf16, #tpu.memory_space<vmem>>, vector<128x128xbf16>
    %cst = arith.constant dense<0.000000e+00> : vector<32x128xf32>
    %3 = tpu.matmul %1, %2, %cst {dimension_numbers = #tpu.dot_dimension_numbers<[1], [0], [0], [1], [0, 0, 1, 1], [], []>} : vector<32x128xbf16>, vector<128x128xbf16>, vector<32x128xf32> -> vector<32x128xf32>
    %c0_3 = arith.constant 0 : index
    %c0_4 = arith.constant 0 : index
    %4 = vector.load %arg3[%c0_3, %c0_4] : memref<1x128xf32, #tpu.memory_space<vmem>>, vector<1x128xf32>
    %5 = vector.broadcast %4 : vector<1x128xf32> to vector<32x128xf32>
    %6 = arith.addf %3, %5 : vector<32x128xf32>
    %c0_5 = arith.constant 0 : index
    %c0_6 = arith.constant 0 : index
    %7 = vector.load %arg4[%c0_5, %c0_6] : memref<32x128xf32, #tpu.memory_space<vmem>>, vector<32x128xf32>
    tpu.vector_store %arg4[%c0_5, %c0_6], %6 {strides = array<i32>} : memref<32x128xf32, #tpu.memory_space<vmem>>, vector<32x128xf32>,
    return
  }
  func.func @transform_0(%arg0: i32) -> (i32, i32) {
    %c0_i32 = arith.constant 0 : i32
    %c0_i32_0 = arith.constant 0 : i32
    return %arg0, %c0_i32 : i32, i32
  }
  func.func @transform_1(%arg0: i32) -> (i32, i32) {
    %c0_i32 = arith.constant 0 : i32
    %c0_i32_0 = arith.constant 0 : i32
    %c0_i32_1 = arith.constant 0 : i32
    return %c0_i32, %c0_i32_0 : i32, i32
  }
  func.func @transform_2(%arg0: i32) -> (i32, i32) {
    %c0_i32 = arith.constant 0 : i32
    %c0_i32_0 = arith.constant 0 : i32
    %c0_i32_1 = arith.constant 0 : i32
    return %c0_i32, %c0_i32_0 : i32, i32
  }
  func.func @transform_3(%arg0: i32) -> (i32, i32) {
    %c0_i32 = arith.constant 0 : i32
    %c0_i32_0 = arith.constant 0 : i32
    return %arg0, %c0_i32 : i32, i32
  }
}

module attributes {stable_mosaic.version = 11 : i64} {
  func.func @_head_kernel(%arg0: i32, %arg1: memref<2x128xf32, #tpu.memory_space<vmem>>, %arg2: memref<1x128xf32, #tpu.memory_space<vmem>>, %arg3: memref<1x128xf32, #tpu.memory_space<vmem>>, %arg4: memref<1x128xf32, #tpu.memory_space<vmem>>, %arg5: memref<128x128xbf16, #tpu.memory_space<vmem>>, %arg6: memref<1x128xf32, #tpu.memory_space<vmem>>, %arg7: memref<2x128xf32, #tpu.memory_space<vmem>>) attributes {dimension_semantics = [#tpu.dimension_semantics<arbitrary>], iteration_bounds = array<i64: 1>, scalar_prefetch = 0 : i64, scratch_operands = 0 : i64, tpu.core_type = #tpu.core_type<tc>, window_params = [{pipeline_mode = #tpu.pipeline_mode<synchronous>, transform_indices = @transform_0, window_bounds = array<i64: 2, 128>}, {pipeline_mode = #tpu.pipeline_mode<synchronous>, transform_indices = @transform_1, window_bounds = array<i64: 1, 128>}, {pipeline_mode = #tpu.pipeline_mode<synchronous>, transform_indices = @transform_2, window_bounds = array<i64: 1, 128>}, {pipeline_mode = #tpu.pipeline_mode<synchronous>, transform_indices = @transform_3, window_bounds = array<i64: 1, 128>}, {pipeline_mode = #tpu.pipeline_mode<synchronous>, transform_indices = @transform_4, window_bounds = array<i64: 128, 128>}, {pipeline_mode = #tpu.pipeline_mode<synchronous>, transform_indices = @transform_5, window_bounds = array<i64: 1, 128>}, {pipeline_mode = #tpu.pipeline_mode<synchronous>, transform_indices = @transform_6, window_bounds = array<i64: 2, 128>}]} {
    %c0 = arith.constant 0 : index
    %c0_0 = arith.constant 0 : index
    %0 = vector.load %arg1[%c0, %c0_0] : memref<2x128xf32, #tpu.memory_space<vmem>>, vector<2x128xf32>
    %c0_1 = arith.constant 0 : index
    %c0_2 = arith.constant 0 : index
    %1 = vector.load %arg3[%c0_1, %c0_2] : memref<1x128xf32, #tpu.memory_space<vmem>>, vector<1x128xf32>
    %c0_3 = arith.constant 0 : index
    %c0_4 = arith.constant 0 : index
    %2 = vector.load %arg4[%c0_3, %c0_4] : memref<1x128xf32, #tpu.memory_space<vmem>>, vector<1x128xf32>
    %c0_5 = arith.constant 0 : index
    %c0_6 = arith.constant 0 : index
    %3 = vector.load %arg2[%c0_5, %c0_6] : memref<1x128xf32, #tpu.memory_space<vmem>>, vector<1x128xf32>
    %cst = arith.constant dense<0.000000e+00> : vector<2xf32>
    %4 = vector.multi_reduction <add>, %0, %cst [1] : vector<2x128xf32> to vector<2xf32>
    %5 = vector.shape_cast %4 : vector<2xf32> to vector<2x1xf32>
    %cst_7 = arith.constant 3.125000e-02 : f32
    %6 = vector.broadcast %cst_7 : f32 to vector<2x1xf32>
    %7 = arith.mulf %5, %6 : vector<2x1xf32>
    %8 = vector.broadcast %7 : vector<2x1xf32> to vector<2x128xf32>
    %9 = arith.subf %0, %8 : vector<2x128xf32>
    %10 = vector.broadcast %3 : vector<1x128xf32> to vector<2x128xf32>
    %11 = arith.mulf %9, %10 : vector<2x128xf32>
    %12 = arith.mulf %11, %11 : vector<2x128xf32>
    %cst_8 = arith.constant dense<0.000000e+00> : vector<2xf32>
    %13 = vector.multi_reduction <add>, %12, %cst_8 [1] : vector<2x128xf32> to vector<2xf32>
    %14 = vector.shape_cast %13 : vector<2xf32> to vector<2x1xf32>
    %cst_9 = arith.constant 3.125000e-02 : f32
    %15 = vector.broadcast %cst_9 : f32 to vector<2x1xf32>
    %16 = arith.mulf %14, %15 : vector<2x1xf32>
    %cst_10 = arith.constant 9.99999997E-7 : f32
    %17 = vector.broadcast %cst_10 : f32 to vector<2x1xf32>
    %18 = arith.addf %16, %17 : vector<2x1xf32>
    %19 = math.rsqrt %18 : vector<2x1xf32>
    %20 = vector.broadcast %19 : vector<2x1xf32> to vector<2x128xf32>
    %21 = arith.mulf %11, %20 : vector<2x128xf32>
    %22 = vector.broadcast %1 : vector<1x128xf32> to vector<2x128xf32>
    %23 = arith.mulf %21, %22 : vector<2x128xf32>
    %24 = vector.broadcast %2 : vector<1x128xf32> to vector<2x128xf32>
    %25 = arith.addf %23, %24 : vector<2x128xf32>
    %26 = arith.truncf %25 : vector<2x128xf32> to vector<2x128xbf16>
    %c0_11 = arith.constant 0 : index
    %c0_12 = arith.constant 0 : index
    %27 = vector.load %arg5[%c0_11, %c0_12] : memref<128x128xbf16, #tpu.memory_space<vmem>>, vector<128x128xbf16>
    %cst_13 = arith.constant dense<0.000000e+00> : vector<2x128xf32>
    %28 = tpu.matmul %26, %27, %cst_13 {dimension_numbers = #tpu.dot_dimension_numbers<[1], [0], [0], [1], [0, 0, 1, 1], [], []>} : vector<2x128xbf16>, vector<128x128xbf16>, vector<2x128xf32> -> vector<2x128xf32>
    %c0_14 = arith.constant 0 : index
    %c0_15 = arith.constant 0 : index
    %29 = vector.load %arg6[%c0_14, %c0_15] : memref<1x128xf32, #tpu.memory_space<vmem>>, vector<1x128xf32>
    %30 = vector.broadcast %29 : vector<1x128xf32> to vector<2x128xf32>
    %31 = arith.addf %28, %30 : vector<2x128xf32>
    %c0_16 = arith.constant 0 : index
    %c0_17 = arith.constant 0 : index
    %32 = vector.load %arg7[%c0_16, %c0_17] : memref<2x128xf32, #tpu.memory_space<vmem>>, vector<2x128xf32>
    tpu.vector_store %arg7[%c0_16, %c0_17], %31 {strides = array<i32>} : memref<2x128xf32, #tpu.memory_space<vmem>>, vector<2x128xf32>,
    return
  }
  func.func @transform_0(%arg0: i32) -> (i32, i32) {
    %c0_i32 = arith.constant 0 : i32
    %c0_i32_0 = arith.constant 0 : i32
    %c0_i32_1 = arith.constant 0 : i32
    return %c0_i32, %c0_i32_0 : i32, i32
  }
  func.func @transform_1(%arg0: i32) -> (i32, i32) {
    %c0_i32 = arith.constant 0 : i32
    %c0_i32_0 = arith.constant 0 : i32
    %c0_i32_1 = arith.constant 0 : i32
    return %c0_i32, %c0_i32_0 : i32, i32
  }
  func.func @transform_2(%arg0: i32) -> (i32, i32) {
    %c0_i32 = arith.constant 0 : i32
    %c0_i32_0 = arith.constant 0 : i32
    %c0_i32_1 = arith.constant 0 : i32
    return %c0_i32, %c0_i32_0 : i32, i32
  }
  func.func @transform_3(%arg0: i32) -> (i32, i32) {
    %c0_i32 = arith.constant 0 : i32
    %c0_i32_0 = arith.constant 0 : i32
    %c0_i32_1 = arith.constant 0 : i32
    return %c0_i32, %c0_i32_0 : i32, i32
  }
  func.func @transform_4(%arg0: i32) -> (i32, i32) {
    %c0_i32 = arith.constant 0 : i32
    %c0_i32_0 = arith.constant 0 : i32
    %c0_i32_1 = arith.constant 0 : i32
    return %c0_i32, %c0_i32_0 : i32, i32
  }
  func.func @transform_5(%arg0: i32) -> (i32, i32) {
    %c0_i32 = arith.constant 0 : i32
    %c0_i32_0 = arith.constant 0 : i32
    %c0_i32_1 = arith.constant 0 : i32
    return %c0_i32, %c0_i32_0 : i32, i32
  }
  func.func @transform_6(%arg0: i32) -> (i32, i32) {
    %c0_i32 = arith.constant 0 : i32
    %c0_i32_0 = arith.constant 0 : i32
    %c0_i32_1 = arith.constant 0 : i32
    return %c0_i32, %c0_i32_0 : i32, i32
  }
}

module attributes {stable_mosaic.version = 11 : i64} {
  func.func @_blocks_kernel(%arg0: i32, %arg1: i32, %arg2: memref<40x128xf32, #tpu.memory_space<vmem>>, %arg3: memref<1x128xf32, #tpu.memory_space<vmem>>, %arg4: memref<1x1x128xf32, #tpu.memory_space<vmem>>, %arg5: memref<1x1x128xf32, #tpu.memory_space<vmem>>, %arg6: memref<1x128x128xbf16, #tpu.memory_space<vmem>>, %arg7: memref<1x1x128xf32, #tpu.memory_space<vmem>>, %arg8: memref<1x1x128xf32, #tpu.memory_space<vmem>>, %arg9: memref<1x1x128xf32, #tpu.memory_space<vmem>>, %arg10: memref<1x128x128xbf16, #tpu.memory_space<vmem>>, %arg11: memref<1x1x128xf32, #tpu.memory_space<vmem>>, %arg12: memref<1x128x128xbf16, #tpu.memory_space<vmem>>, %arg13: memref<1x1x128xf32, #tpu.memory_space<vmem>>, %arg14: memref<40x128xf32, #tpu.memory_space<vmem>>) attributes {dimension_semantics = [#tpu.dimension_semantics<parallel>, #tpu.dimension_semantics<arbitrary>], iteration_bounds = array<i64: 1, 2>, scalar_prefetch = 0 : i64, scratch_operands = 0 : i64, tpu.core_type = #tpu.core_type<tc>, window_params = [{transform_indices = @transform_0, window_bounds = array<i64: 40, 128>}, {pipeline_mode = #tpu.pipeline_mode<synchronous>, transform_indices = @transform_1, window_bounds = array<i64: 1, 128>}, {transform_indices = @transform_2, window_bounds = array<i64: 1, 1, 128>}, {transform_indices = @transform_3, window_bounds = array<i64: 1, 1, 128>}, {transform_indices = @transform_4, window_bounds = array<i64: 1, 128, 128>}, {transform_indices = @transform_5, window_bounds = array<i64: 1, 1, 128>}, {transform_indices = @transform_6, window_bounds = array<i64: 1, 1, 128>}, {transform_indices = @transform_7, window_bounds = array<i64: 1, 1, 128>}, {transform_indices = @transform_8, window_bounds = array<i64: 1, 128, 128>}, {transform_indices = @transform_9, window_bounds = array<i64: 1, 1, 128>}, {transform_indices = @transform_10, window_bounds = array<i64: 1, 128, 128>}, {transform_indices = @transform_11, window_bounds = array<i64: 1, 1, 128>}, {transform_indices = @transform_12, window_bounds = array<i64: 40, 128>}]} {
    %c0_i32 = arith.constant 0 : i32
    %0 = arith.cmpi eq, %arg1, %c0_i32 : i32
    %1 = arith.extui %0 : i1 to i32
    %c0_i32_0 = arith.constant 0 : i32
    %2 = arith.cmpi ne, %1, %c0_i32_0 : i32
    scf.if %2 {
      %c0_51 = arith.constant 0 : index
      %c0_52 = arith.constant 0 : index
      %92 = vector.load %arg2[%c0_51, %c0_52] : memref<40x128xf32, #tpu.memory_space<vmem>>, vector<40x128xf32>
      %c0_53 = arith.constant 0 : index
      %c0_54 = arith.constant 0 : index
      %93 = vector.load %arg14[%c0_53, %c0_54] : memref<40x128xf32, #tpu.memory_space<vmem>>, vector<40x128xf32>
      tpu.vector_store %arg14[%c0_53, %c0_54], %92 {strides = array<i32>} : memref<40x128xf32, #tpu.memory_space<vmem>>, vector<40x128xf32>,
    } else {
    }
    %c0 = arith.constant 0 : index
    %c0_1 = arith.constant 0 : index
    %3 = vector.load %arg14[%c0, %c0_1] : memref<40x128xf32, #tpu.memory_space<vmem>>, vector<40x128xf32>
    %c0_2 = arith.constant 0 : index
    %c0_3 = arith.constant 0 : index
    %4 = vector.load %arg3[%c0_2, %c0_3] : memref<1x128xf32, #tpu.memory_space<vmem>>, vector<1x128xf32>
    %c0_4 = arith.constant 0 : index
    %c0_5 = arith.constant 0 : index
    %c0_6 = arith.constant 0 : index
    %5 = vector.load %arg4[%c0_4, %c0_5, %c0_6] : memref<1x1x128xf32, #tpu.memory_space<vmem>>, vector<1x1x128xf32>
    %6 = vector.shape_cast %5 : vector<1x1x128xf32> to vector<1x128xf32>
    %c0_7 = arith.constant 0 : index
    %c0_8 = arith.constant 0 : index
    %c0_9 = arith.constant 0 : index
    %7 = vector.load %arg5[%c0_7, %c0_8, %c0_9] : memref<1x1x128xf32, #tpu.memory_space<vmem>>, vector<1x1x128xf32>
    %8 = vector.shape_cast %7 : vector<1x1x128xf32> to vector<1x128xf32>
    %cst = arith.constant dense<0.000000e+00> : vector<40xf32>
    %9 = vector.multi_reduction <add>, %3, %cst [1] : vector<40x128xf32> to vector<40xf32>
    %10 = vector.shape_cast %9 : vector<40xf32> to vector<40x1xf32>
    %cst_10 = arith.constant 3.125000e-02 : f32
    %11 = vector.broadcast %cst_10 : f32 to vector<40x1xf32>
    %12 = arith.mulf %10, %11 : vector<40x1xf32>
    %13 = vector.broadcast %12 : vector<40x1xf32> to vector<40x128xf32>
    %14 = arith.subf %3, %13 : vector<40x128xf32>
    %15 = vector.broadcast %4 : vector<1x128xf32> to vector<40x128xf32>
    %16 = arith.mulf %14, %15 : vector<40x128xf32>
    %17 = arith.mulf %16, %16 : vector<40x128xf32>
    %cst_11 = arith.constant dense<0.000000e+00> : vector<40xf32>
    %18 = vector.multi_reduction <add>, %17, %cst_11 [1] : vector<40x128xf32> to vector<40xf32>
    %19 = vector.shape_cast %18 : vector<40xf32> to vector<40x1xf32>
    %cst_12 = arith.constant 3.125000e-02 : f32
    %20 = vector.broadcast %cst_12 : f32 to vector<40x1xf32>
    %21 = arith.mulf %19, %20 : vector<40x1xf32>
    %cst_13 = arith.constant 9.99999997E-7 : f32
    %22 = vector.broadcast %cst_13 : f32 to vector<40x1xf32>
    %23 = arith.addf %21, %22 : vector<40x1xf32>
    %24 = math.rsqrt %23 : vector<40x1xf32>
    %25 = vector.broadcast %24 : vector<40x1xf32> to vector<40x128xf32>
    %26 = arith.mulf %16, %25 : vector<40x128xf32>
    %27 = vector.broadcast %6 : vector<1x128xf32> to vector<40x128xf32>
    %28 = arith.mulf %26, %27 : vector<40x128xf32>
    %29 = vector.broadcast %8 : vector<1x128xf32> to vector<40x128xf32>
    %30 = arith.addf %28, %29 : vector<40x128xf32>
    %31 = arith.truncf %30 : vector<40x128xf32> to vector<40x128xbf16>
    %c0_14 = arith.constant 0 : index
    %c0_15 = arith.constant 0 : index
    %c0_16 = arith.constant 0 : index
    %32 = vector.load %arg6[%c0_14, %c0_15, %c0_16] : memref<1x128x128xbf16, #tpu.memory_space<vmem>>, vector<1x128x128xbf16>
    %33 = vector.shape_cast %32 : vector<1x128x128xbf16> to vector<128x128xbf16>
    %cst_17 = arith.constant dense<0.000000e+00> : vector<40x128xf32>
    %34 = tpu.matmul %31, %33, %cst_17 {dimension_numbers = #tpu.dot_dimension_numbers<[1], [0], [0], [1], [0, 0, 1, 1], [], []>} : vector<40x128xbf16>, vector<128x128xbf16>, vector<40x128xf32> -> vector<40x128xf32>
    %c0_18 = arith.constant 0 : index
    %c0_19 = arith.constant 0 : index
    %c0_20 = arith.constant 0 : index
    %35 = vector.load %arg7[%c0_18, %c0_19, %c0_20] : memref<1x1x128xf32, #tpu.memory_space<vmem>>, vector<1x1x128xf32>
    %36 = vector.shape_cast %35 : vector<1x1x128xf32> to vector<1x128xf32>
    %37 = vector.broadcast %36 : vector<1x128xf32> to vector<40x128xf32>
    %38 = arith.addf %34, %37 : vector<40x128xf32>
    %39 = arith.addf %3, %38 : vector<40x128xf32>
    %c0_21 = arith.constant 0 : index
    %c0_22 = arith.constant 0 : index
    %c0_23 = arith.constant 0 : index
    %40 = vector.load %arg8[%c0_21, %c0_22, %c0_23] : memref<1x1x128xf32, #tpu.memory_space<vmem>>, vector<1x1x128xf32>
    %41 = vector.shape_cast %40 : vector<1x1x128xf32> to vector<1x128xf32>
    %c0_24 = arith.constant 0 : index
    %c0_25 = arith.constant 0 : index
    %c0_26 = arith.constant 0 : index
    %42 = vector.load %arg9[%c0_24, %c0_25, %c0_26] : memref<1x1x128xf32, #tpu.memory_space<vmem>>, vector<1x1x128xf32>
    %43 = vector.shape_cast %42 : vector<1x1x128xf32> to vector<1x128xf32>
    %cst_27 = arith.constant dense<0.000000e+00> : vector<40xf32>
    %44 = vector.multi_reduction <add>, %39, %cst_27 [1] : vector<40x128xf32> to vector<40xf32>
    %45 = vector.shape_cast %44 : vector<40xf32> to vector<40x1xf32>
    %cst_28 = arith.constant 3.125000e-02 : f32
    %46 = vector.broadcast %cst_28 : f32 to vector<40x1xf32>
    %47 = arith.mulf %45, %46 : vector<40x1xf32>
    %48 = vector.broadcast %47 : vector<40x1xf32> to vector<40x128xf32>
    %49 = arith.subf %39, %48 : vector<40x128xf32>
    %50 = vector.broadcast %4 : vector<1x128xf32> to vector<40x128xf32>
    %51 = arith.mulf %49, %50 : vector<40x128xf32>
    %52 = arith.mulf %51, %51 : vector<40x128xf32>
    %cst_29 = arith.constant dense<0.000000e+00> : vector<40xf32>
    %53 = vector.multi_reduction <add>, %52, %cst_29 [1] : vector<40x128xf32> to vector<40xf32>
    %54 = vector.shape_cast %53 : vector<40xf32> to vector<40x1xf32>
    %cst_30 = arith.constant 3.125000e-02 : f32
    %55 = vector.broadcast %cst_30 : f32 to vector<40x1xf32>
    %56 = arith.mulf %54, %55 : vector<40x1xf32>
    %cst_31 = arith.constant 9.99999997E-7 : f32
    %57 = vector.broadcast %cst_31 : f32 to vector<40x1xf32>
    %58 = arith.addf %56, %57 : vector<40x1xf32>
    %59 = math.rsqrt %58 : vector<40x1xf32>
    %60 = vector.broadcast %59 : vector<40x1xf32> to vector<40x128xf32>
    %61 = arith.mulf %51, %60 : vector<40x128xf32>
    %62 = vector.broadcast %41 : vector<1x128xf32> to vector<40x128xf32>
    %63 = arith.mulf %61, %62 : vector<40x128xf32>
    %64 = vector.broadcast %43 : vector<1x128xf32> to vector<40x128xf32>
    %65 = arith.addf %63, %64 : vector<40x128xf32>
    %66 = arith.truncf %65 : vector<40x128xf32> to vector<40x128xbf16>
    %c0_32 = arith.constant 0 : index
    %c0_33 = arith.constant 0 : index
    %c0_34 = arith.constant 0 : index
    %67 = vector.load %arg10[%c0_32, %c0_33, %c0_34] : memref<1x128x128xbf16, #tpu.memory_space<vmem>>, vector<1x128x128xbf16>
    %68 = vector.shape_cast %67 : vector<1x128x128xbf16> to vector<128x128xbf16>
    %cst_35 = arith.constant dense<0.000000e+00> : vector<40x128xf32>
    %69 = tpu.matmul %66, %68, %cst_35 {dimension_numbers = #tpu.dot_dimension_numbers<[1], [0], [0], [1], [0, 0, 1, 1], [], []>} : vector<40x128xbf16>, vector<128x128xbf16>, vector<40x128xf32> -> vector<40x128xf32>
    %c0_36 = arith.constant 0 : index
    %c0_37 = arith.constant 0 : index
    %c0_38 = arith.constant 0 : index
    %70 = vector.load %arg11[%c0_36, %c0_37, %c0_38] : memref<1x1x128xf32, #tpu.memory_space<vmem>>, vector<1x1x128xf32>
    %71 = vector.shape_cast %70 : vector<1x1x128xf32> to vector<1x128xf32>
    %72 = vector.broadcast %71 : vector<1x128xf32> to vector<40x128xf32>
    %73 = arith.addf %69, %72 : vector<40x128xf32>
    %cst_39 = arith.constant 5.000000e-01 : f32
    %74 = vector.broadcast %cst_39 : f32 to vector<40x128xf32>
    %75 = arith.mulf %74, %73 : vector<40x128xf32>
    %cst_40 = arith.constant 0.707106769 : f32
    %76 = vector.broadcast %cst_40 : f32 to vector<40x128xf32>
    %77 = arith.mulf %73, %76 : vector<40x128xf32>
    %78 = math.erf %77 : vector<40x128xf32>
    %cst_41 = arith.constant 1.000000e+00 : f32
    %79 = vector.broadcast %cst_41 : f32 to vector<40x128xf32>
    %80 = arith.addf %79, %78 : vector<40x128xf32>
    %81 = arith.mulf %75, %80 : vector<40x128xf32>
    %82 = arith.truncf %81 : vector<40x128xf32> to vector<40x128xbf16>
    %c0_42 = arith.constant 0 : index
    %c0_43 = arith.constant 0 : index
    %c0_44 = arith.constant 0 : index
    %83 = vector.load %arg12[%c0_42, %c0_43, %c0_44] : memref<1x128x128xbf16, #tpu.memory_space<vmem>>, vector<1x128x128xbf16>
    %84 = vector.shape_cast %83 : vector<1x128x128xbf16> to vector<128x128xbf16>
    %cst_45 = arith.constant dense<0.000000e+00> : vector<40x128xf32>
    %85 = tpu.matmul %82, %84, %cst_45 {dimension_numbers = #tpu.dot_dimension_numbers<[1], [0], [0], [1], [0, 0, 1, 1], [], []>} : vector<40x128xbf16>, vector<128x128xbf16>, vector<40x128xf32> -> vector<40x128xf32>
    %c0_46 = arith.constant 0 : index
    %c0_47 = arith.constant 0 : index
    %c0_48 = arith.constant 0 : index
    %86 = vector.load %arg13[%c0_46, %c0_47, %c0_48] : memref<1x1x128xf32, #tpu.memory_space<vmem>>, vector<1x1x128xf32>
    %87 = vector.shape_cast %86 : vector<1x1x128xf32> to vector<1x128xf32>
    %88 = vector.broadcast %87 : vector<1x128xf32> to vector<40x128xf32>
    %89 = arith.addf %85, %88 : vector<40x128xf32>
    %90 = arith.addf %39, %89 : vector<40x128xf32>
    %c0_49 = arith.constant 0 : index
    %c0_50 = arith.constant 0 : index
    %91 = vector.load %arg14[%c0_49, %c0_50] : memref<40x128xf32, #tpu.memory_space<vmem>>, vector<40x128xf32>
    tpu.vector_store %arg14[%c0_49, %c0_50], %90 {strides = array<i32>} : memref<40x128xf32, #tpu.memory_space<vmem>>, vector<40x128xf32>,
    return
  }
  func.func @transform_0(%arg0: i32, %arg1: i32) -> (i32, i32) {
    %c0_i32 = arith.constant 0 : i32
    %c0_i32_0 = arith.constant 0 : i32
    return %arg0, %c0_i32 : i32, i32
  }
  func.func @transform_1(%arg0: i32, %arg1: i32) -> (i32, i32) {
    %c0_i32 = arith.constant 0 : i32
    %c0_i32_0 = arith.constant 0 : i32
    %c0_i32_1 = arith.constant 0 : i32
    return %c0_i32, %c0_i32_0 : i32, i32
  }
  func.func @transform_2(%arg0: i32, %arg1: i32) -> (i32, i32, i32) {
    %c0_i32 = arith.constant 0 : i32
    %c0_i32_0 = arith.constant 0 : i32
    %c0_i32_1 = arith.constant 0 : i32
    return %arg1, %c0_i32, %c0_i32_0 : i32, i32, i32
  }
  func.func @transform_3(%arg0: i32, %arg1: i32) -> (i32, i32, i32) {
    %c0_i32 = arith.constant 0 : i32
    %c0_i32_0 = arith.constant 0 : i32
    %c0_i32_1 = arith.constant 0 : i32
    return %arg1, %c0_i32, %c0_i32_0 : i32, i32, i32
  }
  func.func @transform_4(%arg0: i32, %arg1: i32) -> (i32, i32, i32) {
    %c0_i32 = arith.constant 0 : i32
    %c0_i32_0 = arith.constant 0 : i32
    %c0_i32_1 = arith.constant 0 : i32
    return %arg1, %c0_i32, %c0_i32_0 : i32, i32, i32
  }
  func.func @transform_5(%arg0: i32, %arg1: i32) -> (i32, i32, i32) {
    %c0_i32 = arith.constant 0 : i32
    %c0_i32_0 = arith.constant 0 : i32
    %c0_i32_1 = arith.constant 0 : i32
    return %arg1, %c0_i32, %c0_i32_0 : i32, i32, i32
  }
  func.func @transform_6(%arg0: i32, %arg1: i32) -> (i32, i32, i32) {
    %c0_i32 = arith.constant 0 : i32
    %c0_i32_0 = arith.constant 0 : i32
    %c0_i32_1 = arith.constant 0 : i32
    return %arg1, %c0_i32, %c0_i32_0 : i32, i32, i32
  }
  func.func @transform_7(%arg0: i32, %arg1: i32) -> (i32, i32, i32) {
    %c0_i32 = arith.constant 0 : i32
    %c0_i32_0 = arith.constant 0 : i32
    %c0_i32_1 = arith.constant 0 : i32
    return %arg1, %c0_i32, %c0_i32_0 : i32, i32, i32
  }
  func.func @transform_8(%arg0: i32, %arg1: i32) -> (i32, i32, i32) {
    %c0_i32 = arith.constant 0 : i32
    %c0_i32_0 = arith.constant 0 : i32
    %c0_i32_1 = arith.constant 0 : i32
    return %arg1, %c0_i32, %c0_i32_0 : i32, i32, i32
  }
  func.func @transform_9(%arg0: i32, %arg1: i32) -> (i32, i32, i32) {
    %c0_i32 = arith.constant 0 : i32
    %c0_i32_0 = arith.constant 0 : i32
    %c0_i32_1 = arith.constant 0 : i32
    return %arg1, %c0_i32, %c0_i32_0 : i32, i32, i32
  }
  func.func @transform_10(%arg0: i32, %arg1: i32) -> (i32, i32, i32) {
    %c0_i32 = arith.constant 0 : i32
    %c0_i32_0 = arith.constant 0 : i32
    %c0_i32_1 = arith.constant 0 : i32
    return %arg1, %c0_i32, %c0_i32_0 : i32, i32, i32
  }
  func.func @transform_11(%arg0: i32, %arg1: i32) -> (i32, i32, i32) {
    %c0_i32 = arith.constant 0 : i32
    %c0_i32_0 = arith.constant 0 : i32
    %c0_i32_1 = arith.constant 0 : i32
    return %arg1, %c0_i32, %c0_i32_0 : i32, i32, i32
  }
  func.func @transform_12(%arg0: i32, %arg1: i32) -> (i32, i32) {
    %c0_i32 = arith.constant 0 : i32
    %c0_i32_0 = arith.constant 0 : i32
    return %arg0, %c0_i32 : i32, i32
  }
}

</mosaic_0001>

<llo_original>
// kernel: vit_forward.5
$region0: #{vit_forward.5}
  #allocation0 [shape = 'u32[]', space=smem, size = 0x4, offset = 0x4, fixed_abs, tag = 'smem constant byte address 0x4 - core index']
  #allocation1 [shape = 'u32[144,128]{1,0:T(1,128)}', space=vmem, size = 0x12000, scoped, tag = 'internal scratch']
  %s0 = inlined_call_operand.vmem [shape: f32[2,128], index: 0, kind: input, shape index: {}]
  %s1 = inlined_call_operand.vmem [shape: f32[1,128], index: 1, kind: input, shape index: {}]
  %s2 = inlined_call_operand.vmem [shape: f32[1,128], index: 2, kind: input, shape index: {}]
  %s3 = inlined_call_operand.vmem [shape: f32[1,128], index: 3, kind: input, shape index: {}]
  %s4 = inlined_call_operand.vmem [shape: bf16[128,128], index: 4, kind: input, shape index: {}]
  %s5 = inlined_call_operand.vmem [shape: f32[1,128], index: 5, kind: input, shape index: {}]
  %s6 = inlined_call_operand.hbm [shape: f32[2,128], index: 6, kind: output, shape index: {}]
  %s7 = sld [smem:[#allocation0]]
  $region34: #{vit_forward.5} parent=0
    _
  %s9 = ssub.s32 1, %s7
  %s10 = scalar_select 0, %s9, %s7
  $region1: #{vit_forward.5} parent=0
    #allocation2 [shape = 'u8[1024]{0}', space=vmem, size = 0x400, scoped, tag = 'output window, operand 0, single buffered']
    #allocation3 [shape = 's32[1]{0}', space=sflag, size = 0x4, scoped, tag = 'scoped memory for vit_forward.5']
    %11 = vsyncpa [#allocation3], 0
    // Predicated region
    $region2: #{vit_forward.5} parent=1 // pred_check
      _
    $region3: #{vit_forward.5} parent=1 // pred_check_branch
      %13 = sbr.rel (0) target = $region5
    $region4: #{vit_forward.5} parent=1 // pred_region
      _
    $region5: #{vit_forward.5} parent=1 // pred_fallthru
      _
    // Predicated region
    $region6: #{vit_forward.5} parent=1 // pred_check
      _
    $region7: #{vit_forward.5} parent=1 // pred_check_branch
      %15 = sbr.rel (0) target = $region9
    $region8: #{vit_forward.5} parent=1 // pred_region
      _
    $region9: #{vit_forward.5} parent=1 // pred_fallthru
      _
    // Predicated region
    $region10: #{vit_forward.5} parent=1 // pred_check
      _
    $region11: #{vit_forward.5} parent=1 // pred_check_branch
      %17 = sbr.rel (0) target = $region13
    $region12: #{vit_forward.5} parent=1 // pred_region
      _
    $region13: #{vit_forward.5} parent=1 // pred_fallthru
      _
    // Predicated region
    $region14: #{vit_forward.5} parent=1 // pred_check
      _
    $region15: #{vit_forward.5} parent=1 // pred_check_branch
      %19 = sbr.rel (0) target = $region17
    $region16: #{vit_forward.5} parent=1 // pred_region
      _
    $region17: #{vit_forward.5} parent=1 // pred_fallthru
      _
    // Predicated region
    $region18: #{vit_forward.5} parent=1 // pred_check
      _
    $region19: #{vit_forward.5} parent=1 // pred_check_branch
      %21 = sbr.rel (0) target = $region21
    $region20: #{vit_forward.5} parent=1 // pred_region
      _
    $region21: #{vit_forward.5} parent=1 // pred_fallthru
      _
    // Predicated region
    $region22: #{vit_forward.5} parent=1 // pred_check
      _
    $region23: #{vit_forward.5} parent=1 // pred_check_branch
      %23 = sbr.rel (0) target = $region25
    $region24: #{vit_forward.5} parent=1 // pred_region
      _
    $region25: #{vit_forward.5} parent=1 // pred_fallthru
      _
    %v25 = vld [vmem:[%s0] sm:$0x3]
    %v26 = vld [vmem:[%s2] sm:$0x1]
    %v27 = vld [vmem:[%s3] sm:$0x1]
    %v28 = vld [vmem:[%s1] sm:$0x1]
    %vm29 = vcmask 1041408
    %v30 = vsel %vm29, %v25, 0.0
    %31 = vadd.xlane.f32.xlu0 %v30
    %v32 = vpop.xlane.xlu0 %31
    %v33 = vmul.f32 %v32, 0.03125
    %v34 = vsub.f32 %v25, %v33
    %v36 = vlaneseq
    %v37 = vshrl.u32 %v36, 7
    %v38 = vsub.s32 0, %v37
    %v39 = vrot.slane %v28, %v38
    %v41 = vmul.f32 %v34, %v39
    %v42 = vmul.f32 %v41, %v41
    %v43 = vsel %vm29, %v42, 0.0
    %44 = vadd.xlane.f32.xlu0 %v43
    %v45 = vpop.xlane.xlu0 %44
    %v46 = vmul.f32 %v45, 0.03125
    %v47 = vadd.f32 %v46, 1e-06
    %v48 = vrsqrt.pop %v47
    %v49 = vmul.f32 %v41, %v48
    %v51 = vlaneseq
    %v52 = vshrl.u32 %v51, 7
    %v53 = vsub.s32 0, %v52
    %v54 = vrot.slane %v26, %v53
    %v56 = vmul.f32 %v49, %v54
    %v58 = vlaneseq
    %v59 = vshrl.u32 %v58, 7
    %v60 = vsub.s32 0, %v59
    %v61 = vrot.slane %v27, %v60
    %v63 = vadd.f32 %v56, %v61
    %v64 = vpack.c.bf16 %v63, %v63
    %v65 = vld [vmem:[%s4] sm:$0xf]
    %v66 = vld [vmem:[%s4 + $0x4] sm:$0xf]
    %v67 = vld [vmem:[%s4 + $0x8] sm:$0xf]
    %v68 = vld [vmem:[%s4 + $0xc] sm:$0xf]
    %v69 = vld [vmem:[%s4 + $0x10] sm:$0xf]
    %v70 = vld [vmem:[%s4 + $0x14] sm:$0xf]
    %v71 = vld [vmem:[%s4 + $0x18] sm:$0xf]
    %v72 = vld [vmem:[%s4 + $0x1c] sm:$0xf]
    %v73 = vld [vmem:[%s4 + $0x20] sm:$0xf]
    %v74 = vld [vmem:[%s4 + $0x24] sm:$0xf]
    %v75 = vld [vmem:[%s4 + $0x28] sm:$0xf]
    %v76 = vld [vmem:[%s4 + $0x2c] sm:$0xf]
    %v77 = vld [vmem:[%s4 + $0x30] sm:$0xf]
    %v78 = vld [vmem:[%s4 + $0x34] sm:$0xf]
    %v79 = vld [vmem:[%s4 + $0x38] sm:$0xf]
    %v80 = vld [vmem:[%s4 + $0x3c] sm:$0xf]
    %v81 = vld [vmem:[%s5] sm:$0x1]
    %v83 = vlaneseq
    %v84 = vshrl.u32 %v83, 7
    %v85 = vsub.s32 0, %v84
    %v86 = vrot.slane %v81, %v85
    %v104 = vunpack.c.l.b16 %v65
    %v105 = vunpack.c.l.b16 %v66
    %v106 = vunpack.c.l.b16 %v67
    %v107 = vunpack.c.l.b16 %v68
    %v108 = vunpack.c.l.b16 %v69
    %v109 = vunpack.c.l.b16 %v70
    %v110 = vunpack.c.l.b16 %v71
    %v111 = vunpack.c.l.b16 %v72
    %v112 = vunpack.c.l.b16 %v73
    %v113 = vunpack.c.l.b16 %v74
    %v114 = vunpack.c.l.b16 %v75
    %v115 = vunpack.c.l.b16 %v76
    %v116 = vunpack.c.l.b16 %v77
    %v117 = vunpack.c.l.b16 %v78
    %v118 = vunpack.c.l.b16 %v79
    %v119 = vunpack.c.l.b16 %v80
    %v120 = vpack.c.b16 %v105, %v104
    %v121 = vpack.c.b16 %v107, %v106
    %v122 = vpack.c.b16 %v109, %v108
    %v123 = vpack.c.b16 %v111, %v110
    %v124 = vpack.c.b16 %v113, %v112
    %v125 = vpack.c.b16 %v115, %v114
    %v126 = vpack.c.b16 %v117, %v116
    %v127 = vpack.c.b16 %v119, %v118
    %136 = vmatprep.subr.bf16.mxu0 0
    %137 = vmatpush1.bf16.msra.mxu0 %v127
    %138 = vmatprep.subr.bf16.mxu0 0
    %139 = vmatpush1.bf16.msra.mxu0 %v126
    %140 = vmatprep.subr.bf16.mxu0 0
    %141 = vmatpush1.bf16.msra.mxu0 %v125
    %142 = vmatprep.subr.bf16.mxu0 0
    %143 = vmatpush1.bf16.msra.mxu0 %v124
    %144 = vmatprep.subr.bf16.mxu0 0
    %145 = vmatpush1.bf16.msra.mxu0 %v123
    %146 = vmatprep.subr.bf16.mxu0 0
    %147 = vmatpush1.bf16.msra.mxu0 %v122
    %148 = vmatprep.subr.bf16.mxu0 0
    %149 = vmatpush1.bf16.msra.mxu0 %v121
    %150 = vmatprep.subr.bf16.mxu0 0
    %151 = vmatpush1.bf16.msra.mxu0 %v120
    %152 = vmatprep.subr.bf16.mxu0 0
    %153 = vmatpush2.bf16.msra.mxu0 0
    %154 = vmatprep.subr.bf16.mxu0 0
    %155 = vmatpush2.bf16.msra.mxu0 0
    %156 = vmatprep.subr.bf16.mxu0 0
    %157 = vmatpush2.bf16.msra.mxu0 0
    %158 = vmatprep.subr.bf16.mxu0 0
    %159 = vmatpush2.bf16.msra.mxu0 0
    %160 = vmatprep.subr.bf16.mxu0 0
    %161 = vmatpush2.bf16.msra.mxu0 0
    %162 = vmatprep.subr.bf16.mxu0 0
    %163 = vmatpush2.bf16.msra.mxu0 0
    %164 = vmatprep.subr.bf16.mxu0 0
    %165 = vmatpush2.bf16.msra.mxu0 0
    %166 = vmatprep.subr.bf16.mxu0 0
    %167 = vmatpush2.bf16.msra.mxu0 0
    %168 = vmatprep.mubr.bf16.mxu0 0
    %169 = vmatmul.mubr.bf16.gmra.mxu0 %v64
    %v170 = vpop.f32.mrf.mxu0
    %v171 = vadd.f32 %v86, %v170
    %v172 = vpop.f32.mrf.mxu0
    %v173 = vpop.f32.mrf.mxu0
    %v174 = vpop.f32.mrf.mxu0
    %175 = vdwg.mxu0
    %176 = vst [vmem:[#allocation2] sm:$0x3] %v171
    // Predicated region
    $region26: #{vit_forward.5} parent=1 // pred_check
      _
    $region27: #{vit_forward.5} parent=1 // pred_check_branch
      %178 = sbr.rel (0) target = $region29
    $region28: #{vit_forward.5} parent=1 // pred_region
      %s180 = ssub.s32 32, 32
      %181 = vsyncadd [#allocation3], %s180
      %s183 = sshll.u32 [#allocation2], 4
      %s184 = int_to_ptr.vmem [resolvable:$true] %s183
      %186 = dma.vmem_to_hbm [thread:$0]  %s184, 32, %s6, [#allocation3]
    $region29: #{vit_forward.5} parent=1 // pred_fallthru
      _
    // Predicated region
    $region30: #{vit_forward.5} parent=1 // pred_check
      _
    $region31: #{vit_forward.5} parent=1 // pred_check_branch
      %188 = sbr.rel (0) target = $region33
    $region32: #{vit_forward.5} parent=1 // pred_region
      %189 = dma.done [#allocation3], 32
    $region33: #{vit_forward.5} parent=1 // pred_fallthru
      _
    %190 = vsyncpa [#allocation3], 1

// kernel: vit_forward.3
$region0: #{vit_forward.3}
  #allocation0 [shape = 'u32[]', space=smem, size = 0x4, offset = 0x4, fixed_abs, tag = 'smem constant byte address 0x4 - core index']
  #allocation1 [shape = 'u32[144,128]{1,0:T(1,128)}', space=vmem, size = 0x12000, scoped, tag = 'internal scratch']
  %s0 = inlined_call_operand.vmem [shape: f32[32,128], index: 0, kind: input, shape index: {}]
  %s1 = inlined_call_operand.vmem [shape: bf16[128,128], index: 1, kind: input, shape index: {}]
  %s2 = inlined_call_operand.vmem [shape: f32[1,128], index: 2, kind: input, shape index: {}]
  %s3 = inlined_call_operand.vmem [shape: f32[32,128], index: 3, kind: output, shape index: {}]
  %s4 = sld [smem:[#allocation0]]
  $region22: #{vit_forward.3} parent=0
    _
  %s6 = ssub.s32 1, %s4
  %s7 = scalar_select 0, %s6, %s4
  // Predicated region
  $region2: #{vit_forward.3} parent=0 // pred_check
    _
  $region3: #{vit_forward.3} parent=0 // pred_check_branch
    %9 = sbr.rel (0) target = $region5
  $region4: #{vit_forward.3} parent=0 // pred_region
    _
  $region5: #{vit_forward.3} parent=0 // pred_fallthru
    _
  // Predicated region
  $region6: #{vit_forward.3} parent=0 // pred_check
    _
  $region7: #{vit_forward.3} parent=0 // pred_check_branch
    %11 = sbr.rel (0) target = $region9
  $region8: #{vit_forward.3} parent=0 // pred_region
    _
  $region9: #{vit_forward.3} parent=0 // pred_fallthru
    _
  // Predicated region
  $region10: #{vit_forward.3} parent=0 // pred_check
    _
  $region11: #{vit_forward.3} parent=0 // pred_check_branch
    %13 = sbr.rel (0) target = $region13
  $region12: #{vit_forward.3} parent=0 // pred_region
    _
  $region13: #{vit_forward.3} parent=0 // pred_fallthru
    _
  %v15 = vld [vmem:[%s0] sm:$0xff]
  %v16 = vld [vmem:[%s0 + $0x8] sm:$0xff]
  %v17 = vld [vmem:[%s0 + $0x10] sm:$0xff]
  %v18 = vld [vmem:[%s0 + $0x18] sm:$0xff]
  %v19 = vpack.c.bf16 %v16, %v15
  %v20 = vpack.c.bf16 %v18, %v17
  %v21 = vld [vmem:[%s1] sm:$0xf]
  %v22 = vld [vmem:[%s1 + $0x4] sm:$0xf]
  %v23 = vld [vmem:[%s1 + $0x8] sm:$0xf]
  %v24 = vld [vmem:[%s1 + $0xc] sm:$0xf]
  %v25 = vld [vmem:[%s1 + $0x10] sm:$0xf]
  %v26 = vld [vmem:[%s1 + $0x14] sm:$0xf]
  %v27 = vld [vmem:[%s1 + $0x18] sm:$0xf]
  %v28 = vld [vmem:[%s1 + $0x1c] sm:$0xf]
  %v29 = vld [vmem:[%s1 + $0x20] sm:$0xf]
  %v30 = vld [vmem:[%s1 + $0x24] sm:$0xf]
  %v31 = vld [vmem:[%s1 + $0x28] sm:$0xf]
  %v32 = vld [vmem:[%s1 + $0x2c] sm:$0xf]
  %v33 = vld [vmem:[%s1 + $0x30] sm:$0xf]
  %v34 = vld [vmem:[%s1 + $0x34] sm:$0xf]
  %v35 = vld [vmem:[%s1 + $0x38] sm:$0xf]
  %v36 = vld [vmem:[%s1 + $0x3c] sm:$0xf]
  %v37 = vld [vmem:[%s2] sm:$0x1]
  %v39 = vlaneseq
  %v40 = vshrl.u32 %v39, 7
  %v41 = vsub.s32 0, %v40
  %v42 = vrot.slane %v37, %v41
  %v60 = vunpack.c.l.b16 %v21
  %v61 = vunpack.c.l.b16 %v22
  %v62 = vunpack.c.l.b16 %v23
  %v63 = vunpack.c.l.b16 %v24
  %v64 = vunpack.c.l.b16 %v25
  %v65 = vunpack.c.l.b16 %v26
  %v66 = vunpack.c.l.b16 %v27
  %v67 = vunpack.c.l.b16 %v28
  %v68 = vunpack.c.l.b16 %v29
  %v69 = vunpack.c.l.b16 %v30
  %v70 = vunpack.c.l.b16 %v31
  %v71 = vunpack.c.l.b16 %v32
  %v72 = vunpack.c.l.b16 %v33
  %v73 = vunpack.c.l.b16 %v34
  %v74 = vunpack.c.l.b16 %v35
  %v75 = vunpack.c.l.b16 %v36
  %v76 = vpack.c.b16 %v61, %v60
  %v77 = vpack.c.b16 %v63, %v62
  %v78 = vpack.c.b16 %v65, %v64
  %v79 = vpack.c.b16 %v67, %v66
  %v80 = vpack.c.b16 %v69, %v68
  %v81 = vpack.c.b16 %v71, %v70
  %v82 = vpack.c.b16 %v73, %v72
  %v83 = vpack.c.b16 %v75, %v74
  %92 = vmatprep.subr.bf16.mxu0 0
  %93 = vmatpush1.bf16.msra.mxu0 %v83
  %94 = vmatprep.subr.bf16.mxu0 0
  %95 = vmatpush1.bf16.msra.mxu0 %v82
  %96 = vmatprep.subr.bf16.mxu0 0
  %97 = vmatpush1.bf16.msra.mxu0 %v81
  %98 = vmatprep.subr.bf16.mxu0 0
  %99 = vmatpush1.bf16.msra.mxu0 %v80
  %100 = vmatprep.subr.bf16.mxu0 0
  %101 = vmatpush1.bf16.msra.mxu0 %v79
  %102 = vmatprep.subr.bf16.mxu0 0
  %103 = vmatpush1.bf16.msra.mxu0 %v78
  %104 = vmatprep.subr.bf16.mxu0 0
  %105 = vmatpush1.bf16.msra.mxu0 %v77
  %106 = vmatprep.subr.bf16.mxu0 0
  %107 = vmatpush1.bf16.msra.mxu0 %v76
  %108 = vmatprep.subr.bf16.mxu0 0
  %109 = vmatpush2.bf16.msra.mxu0 0
  %110 = vmatprep.subr.bf16.mxu0 0
  %111 = vmatpush2.bf16.msra.mxu0 0
  %112 = vmatprep.subr.bf16.mxu0 0
  %113 = vmatpush2.bf16.msra.mxu0 0
  %114 = vmatprep.subr.bf16.mxu0 0
  %115 = vmatpush2.bf16.msra.mxu0 0
  %116 = vmatprep.subr.bf16.mxu0 0
  %117 = vmatpush2.bf16.msra.mxu0 0
  %118 = vmatprep.subr.bf16.mxu0 0
  %119 = vmatpush2.bf16.msra.mxu0 0
  %120 = vmatprep.subr.bf16.mxu0 0
  %121 = vmatpush2.bf16.msra.mxu0 0
  %122 = vmatprep.subr.bf16.mxu0 0
  %123 = vmatpush2.bf16.msra.mxu0 0
  %124 = vmatprep.mubr.bf16.mxu0 0
  %125 = vmatmul.mubr.bf16.gmra.mxu0 %v19
  %v126 = vpop.f32.mrf.mxu0
  %v127 = vadd.f32 %v42, %v126
  %v128 = vpop.f32.mrf.mxu0
  %v129 = vpop.f32.mrf.mxu0
  %v130 = vadd.f32 %v42, %v129
  %v131 = vpop.f32.mrf.mxu0
  %132 = vmatprep.mubr.bf16.mxu0 0
  %133 = vmatmul.mubr.bf16.gmra.mxu0 %v20
  %v134 = vpop.f32.mrf.mxu0
  %v135 = vadd.f32 %v42, %v134
  %v136 = vpop.f32.mrf.mxu0
  %v137 = vpop.f32.mrf.mxu0
  %v138 = vadd.f32 %v42, %v137
  %v139 = vpop.f32.mrf.mxu0
  %140 = vdwg.mxu0
  %141 = vst [vmem:[%s3] sm:$0xff] %v127
  %142 = vst [vmem:[%s3 + $0x8] sm:$0xff] %v130
  %143 = vst [vmem:[%s3 + $0x10] sm:$0xff] %v135
  %144 = vst [vmem:[%s3 + $0x18] sm:$0xff] %v138
  // Predicated region
  $region14: #{vit_forward.3} parent=0 // pred_check
    _
  $region15: #{vit_forward.3} parent=0 // pred_check_branch
    %146 = sbr.rel (0) target = $region17
  $region16: #{vit_forward.3} parent=0 // pred_region
    _
  $region17: #{vit_forward.3} parent=0 // pred_fallthru
    _
  // Predicated region
  $region18: #{vit_forward.3} parent=0 // pred_check
    _
  $region19: #{vit_forward.3} parent=0 // pred_check_branch
    %148 = sbr.rel (0) target = $region21
  $region20: #{vit_forward.3} parent=0 // pred_region
    _
  $region21: #{vit_forward.3} parent=0 // pred_fallthru
    _

// kernel: vit_forward.4
$region0: #{vit_forward.4}
  #allocation0 [shape = 'u32[]', space=smem, size = 0x4, offset = 0x4, fixed_abs, tag = 'smem constant byte address 0x4 - core index']
  #allocation1 [shape = 'u32[144,128]{1,0:T(1,128)}', space=vmem, size = 0x12000, scoped, tag = 'internal scratch']
  %s0 = inlined_call_operand.vmem [shape: f32[40,128], index: 0, kind: input, shape index: {}]
  %s1 = inlined_call_operand.vmem [shape: f32[1,128], index: 1, kind: input, shape index: {}]
  %s2 = inlined_call_operand.vmem [shape: f32[2,1,128], index: 2, kind: input, shape index: {}]
  %s3 = inlined_call_operand.vmem [shape: f32[2,1,128], index: 3, kind: input, shape index: {}]
  %s4 = inlined_call_operand.vmem [shape: bf16[2,128,128], index: 4, kind: input, shape index: {}]
  %s5 = inlined_call_operand.vmem [shape: f32[2,1,128], index: 5, kind: input, shape index: {}]
  %s6 = inlined_call_operand.vmem [shape: f32[2,1,128], index: 6, kind: input, shape index: {}]
  %s7 = inlined_call_operand.vmem [shape: f32[2,1,128], index: 7, kind: input, shape index: {}]
  %s8 = inlined_call_operand.vmem [shape: bf16[2,128,128], index: 8, kind: input, shape index: {}]
  %s9 = inlined_call_operand.vmem [shape: f32[2,1,128], index: 9, kind: input, shape index: {}]
  %s10 = inlined_call_operand.vmem [shape: bf16[2,128,128], index: 10, kind: input, shape index: {}]
  %s11 = inlined_call_operand.vmem [shape: f32[2,1,128], index: 11, kind: input, shape index: {}]
  %s12 = inlined_call_operand.vmem [shape: f32[40,128], index: 12, kind: output, shape index: {}]
  %s13 = sld [smem:[#allocation0]]
  $region85: #{vit_forward.4} parent=0
    _
  %s15 = ssub.s32 1, %s13
  %s16 = scalar_select 0, %s15, %s13
  loop: start=0, step=1, limit=4
  $region2: #{vit_forward.4} parent=0 // loop_pre_header
    _
  $region3: #{vit_forward.4} parent=0 // loop_header
    %s18 = sphi 0, %s22
    %p19 = scmp.ge.s32.totalorder %s18, 4
    %s25 = sphi 0, %s37
    %s26 = sphi 0, %s33
    %s27 = sphi 0, %s25
    %s28 = sphi 0, %s26
    %s29 = sphi 0, %s27
    %s30 = sphi 0, %s28
    %s40 = sphi 0, %s42
    %s43 = sphi 0, %s40
    %s44 = sphi 0, %s43
    %s60 = sphi 0, %s44
    %s64 = sphi 0, %s64
    %s66 = sphi 0, %s64
    %s67 = sphi 0, %s66
    %s81 = sphi 0, %s67
    %s87 = sphi 0, %s89
    %s90 = sphi 0, %s87
    %s91 = sphi 0, %s90
    %s107 = sphi 0, %s91
    %s113 = sphi 0, %s115
    %s116 = sphi 0, %s113
    %s117 = sphi 0, %s116
    %s133 = sphi 0, %s117
    %s139 = sphi 0, %s141
    %s142 = sphi 0, %s139
    %s143 = sphi 0, %s142
    %s159 = sphi 0, %s143
    %s165 = sphi 0, %s167
    %s168 = sphi 0, %s165
    %s169 = sphi 0, %s168
    %s185 = sphi 0, %s169
    %s191 = sphi 0, %s193
    %s194 = sphi 0, %s191
    %s195 = sphi 0, %s194
    %s211 = sphi 0, %s195
    %s217 = sphi 0, %s219
    %s220 = sphi 0, %s217
    %s221 = sphi 0, %s220
    %s237 = sphi 0, %s221
    %s243 = sphi 0, %s245
    %s246 = sphi 0, %s243
    %s247 = sphi 0, %s246
    %s263 = sphi 0, %s247
    %s269 = sphi 0, %s271
    %s272 = sphi 0, %s269
    %s273 = sphi 0, %s272
    %s289 = sphi 0, %s273
    %s295 = sphi 0, %s297
    %s298 = sphi 0, %s295
    %s299 = sphi 0, %s298
    %s315 = sphi 0, %s299
    %s321 = sphi 0, %s323
    %s324 = sphi 0, %s321
    %s325 = sphi 0, %s324
    %s341 = sphi 0, %s325
    %s347 = sphi 0, %s349
    %s350 = sphi 0, %s347
    %s351 = sphi 0, %s350
    %s367 = sphi 0, %s351
  $region4: #{vit_forward.4} parent=0 // loop_header_branch
    %21 = sbr.rel (%p19) target = $region8
  $region5: #{vit_forward.4} parent=0 // loop_body
    %s23 = ssub.s32 %s18, 1
    %s24 = ssub.s32 %s18, 2
    %s31 = sadd.s32 1, %s26
    %p32 = scmp.ge.s32.totalorder %s31, 2
    %s33 = scalar_select %p32, 0, %s31
    %s34 = sadd.s32 1, %s25
    %s35 = scalar_select %p32, %s34, %s25
    %p36 = scmp.ge.s32.totalorder %s35, 1
    %s37 = scalar_select %p36, 0, %s35
    %s38 = ssub.s32 %s25, %s37
    %p39 = scmp.eq.s32.totalorder %s38, 0
    %s41 = sadd.s32 %s40, 1
    %s42 = scalar_select %p39, %s40, %s41
    %p45 = pneg %p39
    %p46 = scmp.eq.s32.totalorder %s18, 1
    %p47 = por %p45, %p46
    %p48 = scmp.ne.s32.totalorder %s40, %s43
    %p49 = scmp.eq.s32.totalorder %s18, 0
    %p50 = por %p48, %p49
    %p51 = scmp.ne.s32.totalorder %s40, %s43
    %p52 = scmp.eq.s32.totalorder %s23, 1
    %p53 = por %p51, %p52
    %p54 = scmp.ne.s32.totalorder %s43, %s44
    %p55 = scmp.eq.s32.totalorder %s23, 0
    %p56 = por %p54, %p55
    %p57 = scmp.ne.s32.totalorder %s43, %s44
    %p58 = scmp.eq.s32.totalorder %s24, 1
    %p59 = por %p57, %p58
    %p61 = scmp.ne.s32.totalorder %s44, %s60
    %p62 = scmp.eq.s32.totalorder %s24, 0
    %p63 = por %p61, %p62
    %s65 = sadd.s32 %s64, 1
    %p68 = scmp.eq.s32.totalorder %s18, 1
    %p69 = scmp.ne.s32.totalorder %s64, %s66
    %p70 = scmp.eq.s32.totalorder %s18, 0
    %p71 = por %p69, %p70
    %p72 = scmp.ne.s32.totalorder %s64, %s66
    %p73 = scmp.eq.s32.totalorder %s23, 1
    %p74 = por %p72, %p73
    %p75 = scmp.ne.s32.totalorder %s66, %s67
    %p76 = scmp.eq.s32.totalorder %s23, 0
    %p77 = por %p75, %p76
    %p78 = scmp.ne.s32.totalorder %s66, %s67
    %p79 = scmp.eq.s32.totalorder %s24, 1
    %p80 = por %p78, %p79
    %p82 = scmp.ne.s32.totalorder %s67, %s81
    %p83 = scmp.eq.s32.totalorder %s24, 0
    %p84 = por %p82, %p83
    %s85 = ssub.s32 %s26, %s33
    %p86 = scmp.eq.s32.totalorder %s85, 0
    %s88 = sadd.s32 %s87, 1
    %s89 = scalar_select %p86, %s87, %s88
    %p92 = pneg %p86
    %p93 = scmp.eq.s32.totalorder %s18, 1
    %p94 = por %p92, %p93
    %p95 = scmp.ne.s32.totalorder %s87, %s90
    %p96 = scmp.eq.s32.totalorder %s18, 0
    %p97 = por %p95, %p96
    %p98 = scmp.ne.s32.totalorder %s87, %s90
    %p99 = scmp.eq.s32.totalorder %s23, 1
    %p100 = por %p98, %p99
    %p101 = scmp.ne.s32.totalorder %s90, %s91
    %p102 = scmp.eq.s32.totalorder %s23, 0
    %p103 = por %p101, %p102
    %p104 = scmp.ne.s32.totalorder %s90, %s91
    %p105 = scmp.eq.s32.totalorder %s24, 1
    %p106 = por %p104, %p105
    %p108 = scmp.ne.s32.totalorder %s91, %s107
    %p109 = scmp.eq.s32.totalorder %s24, 0
    %p110 = por %p108, %p109
    %s111 = ssub.s32 %s26, %s33
    %p112 = scmp.eq.s32.totalorder %s111, 0
    %s114 = sadd.s32 %s113, 1
    %s115 = scalar_select %p112, %s113, %s114
    %p118 = pneg %p112
    %p119 = scmp.eq.s32.totalorder %s18, 1
    %p120 = por %p118, %p119
    %p121 = scmp.ne.s32.totalorder %s113, %s116
    %p122 = scmp.eq.s32.totalorder %s18, 0
    %p123 = por %p121, %p122
    %p124 = scmp.ne.s32.totalorder %s113, %s116
    %p125 = scmp.eq.s32.totalorder %s23, 1
    %p126 = por %p124, %p125
    %p127 = scmp.ne.s32.totalorder %s116, %s117
    %p128 = scmp.eq.s32.totalorder %s23, 0
    %p129 = por %p127, %p128
    %p130 = scmp.ne.s32.totalorder %s116, %s117
    %p131 = scmp.eq.s32.totalorder %s24, 1
    %p132 = por %p130, %p131
    %p134 = scmp.ne.s32.totalorder %s117, %s133
    %p135 = scmp.eq.s32.totalorder %s24, 0
    %p136 = por %p134, %p135
    %s137 = ssub.s32 %s26, %s33
    %p138 = scmp.eq.s32.totalorder %s137, 0
    %s140 = sadd.s32 %s139, 1
    %s141 = scalar_select %p138, %s139, %s140
    %p144 = pneg %p138
    %p145 = scmp.eq.s32.totalorder %s18, 1
    %p146 = por %p144, %p145
    %p147 = scmp.ne.s32.totalorder %s139, %s142
    %p148 = scmp.eq.s32.totalorder %s18, 0
    %p149 = por %p147, %p148
    %p150 = scmp.ne.s32.totalorder %s139, %s142
    %p151 = scmp.eq.s32.totalorder %s23, 1
    %p152 = por %p150, %p151
    %p153 = scmp.ne.s32.totalorder %s142, %s143
    %p154 = scmp.eq.s32.totalorder %s23, 0
    %p155 = por %p153, %p154
    %p156 = scmp.ne.s32.totalorder %s142, %s143
    %p157 = scmp.eq.s32.totalorder %s24, 1
    %p158 = por %p156, %p157
    %p160 = scmp.ne.s32.totalorder %s143, %s159
    %p161 = scmp.eq.s32.totalorder %s24, 0
    %p162 = por %p160, %p161
    %s163 = ssub.s32 %s26, %s33
    %p164 = scmp.eq.s32.totalorder %s163, 0
    %s166 = sadd.s32 %s165, 1
    %s167 = scalar_select %p164, %s165, %s166
    %p170 = pneg %p164
    %p171 = scmp.eq.s32.totalorder %s18, 1
    %p172 = por %p170, %p171
    %p173 = scmp.ne.s32.totalorder %s165, %s168
    %p174 = scmp.eq.s32.totalorder %s18, 0
    %p175 = por %p173, %p174
    %p176 = scmp.ne.s32.totalorder %s165, %s168
    %p177 = scmp.eq.s32.totalorder %s23, 1
    %p178 = por %p176, %p177
    %p179 = scmp.ne.s32.totalorder %s168, %s169
    %p180 = scmp.eq.s32.totalorder %s23, 0
    %p181 = por %p179, %p180
    %p182 = scmp.ne.s32.totalorder %s168, %s169
    %p183 = scmp.eq.s32.totalorder %s24, 1
    %p184 = por %p182, %p183
    %p186 = scmp.ne.s32.totalorder %s169, %s185
    %p187 = scmp.eq.s32.totalorder %s24, 0
    %p188 = por %p186, %p187
    %s189 = ssub.s32 %s26, %s33
    %p190 = scmp.eq.s32.totalorder %s189, 0
    %s192 = sadd.s32 %s191, 1
    %s193 = scalar_select %p190, %s191, %s192
    %p196 = pneg %p190
    %p197 = scmp.eq.s32.totalorder %s18, 1
    %p198 = por %p196, %p197
    %p199 = scmp.ne.s32.totalorder %s191, %s194
    %p200 = scmp.eq.s32.totalorder %s18, 0
    %p201 = por %p199, %p200
    %p202 = scmp.ne.s32.totalorder %s191, %s194
    %p203 = scmp.eq.s32.totalorder %s23, 1
    %p204 = por %p202, %p203
    %p205 = scmp.ne.s32.totalorder %s194, %s195
    %p206 = scmp.eq.s32.totalorder %s23, 0
    %p207 = por %p205, %p206
    %p208 = scmp.ne.s32.totalorder %s194, %s195
    %p209 = scmp.eq.s32.totalorder %s24, 1
    %p210 = por %p208, %p209
    %p212 = scmp.ne.s32.totalorder %s195, %s211
    %p213 = scmp.eq.s32.totalorder %s24, 0
    %p214 = por %p212, %p213
    %s215 = ssub.s32 %s26, %s33
    %p216 = scmp.eq.s32.totalorder %s215, 0
    %s218 = sadd.s32 %s217, 1
    %s219 = scalar_select %p216, %s217, %s218
    %p222 = pneg %p216
    %p223 = scmp.eq.s32.totalorder %s18, 1
    %p224 = por %p222, %p223
    %p225 = scmp.ne.s32.totalorder %s217, %s220
    %p226 = scmp.eq.s32.totalorder %s18, 0
    %p227 = por %p225, %p226
    %p228 = scmp.ne.s32.totalorder %s217, %s220
    %p229 = scmp.eq.s32.totalorder %s23, 1
    %p230 = por %p228, %p229
    %p231 = scmp.ne.s32.totalorder %s220, %s221
    %p232 = scmp.eq.s32.totalorder %s23, 0
    %p233 = por %p231, %p232
    %p234 = scmp.ne.s32.totalorder %s220, %s221
    %p235 = scmp.eq.s32.totalorder %s24, 1
    %p236 = por %p234, %p235
    %p238 = scmp.ne.s32.totalorder %s221, %s237
    %p239 = scmp.eq.s32.totalorder %s24, 0
    %p240 = por %p238, %p239
    %s241 = ssub.s32 %s26, %s33
    %p242 = scmp.eq.s32.totalorder %s241, 0
    %s244 = sadd.s32 %s243, 1
    %s245 = scalar_select %p242, %s243, %s244
    %p248 = pneg %p242
    %p249 = scmp.eq.s32.totalorder %s18, 1
    %p250 = por %p248, %p249
    %p251 = scmp.ne.s32.totalorder %s243, %s246
    %p252 = scmp.eq.s32.totalorder %s18, 0
    %p253 = por %p251, %p252
    %p254 = scmp.ne.s32.totalorder %s243, %s246
    %p255 = scmp.eq.s32.totalorder %s23, 1
    %p256 = por %p254, %p255
    %p257 = scmp.ne.s32.totalorder %s246, %s247
    %p258 = scmp.eq.s32.totalorder %s23, 0
    %p259 = por %p257, %p258
    %p260 = scmp.ne.s32.totalorder %s246, %s247
    %p261 = scmp.eq.s32.totalorder %s24, 1
    %p262 = por %p260, %p261
    %p264 = scmp.ne.s32.totalorder %s247, %s263
    %p265 = scmp.eq.s32.totalorder %s24, 0
    %p266 = por %p264, %p265
    %s267 = ssub.s32 %s26, %s33
    %p268 = scmp.eq.s32.totalorder %s267, 0
    %s270 = sadd.s32 %s269, 1
    %s271 = scalar_select %p268, %s269, %s270
    %p274 = pneg %p268
    %p275 = scmp.eq.s32.totalorder %s18, 1
    %p276 = por %p274, %p275
    %p277 = scmp.ne.s32.totalorder %s269, %s272
    %p278 = scmp.eq.s32.totalorder %s18, 0
    %p279 = por %p277, %p278
    %p280 = scmp.ne.s32.totalorder %s269, %s272
    %p281 = scmp.eq.s32.totalorder %s23, 1
    %p282 = por %p280, %p281
    %p283 = scmp.ne.s32.totalorder %s272, %s273
    %p284 = scmp.eq.s32.totalorder %s23, 0
    %p285 = por %p283, %p284
    %p286 = scmp.ne.s32.totalorder %s272, %s273
    %p287 = scmp.eq.s32.totalorder %s24, 1
    %p288 = por %p286, %p287
    %p290 = scmp.ne.s32.totalorder %s273, %s289
    %p291 = scmp.eq.s32.totalorder %s24, 0
    %p292 = por %p290, %p291
    %s293 = ssub.s32 %s26, %s33
    %p294 = scmp.eq.s32.totalorder %s293, 0
    %s296 = sadd.s32 %s295, 1
    %s297 = scalar_select %p294, %s295, %s296
    %p300 = pneg %p294
    %p301 = scmp.eq.s32.totalorder %s18, 1
    %p302 = por %p300, %p301
    %p303 = scmp.ne.s32.totalorder %s295, %s298
    %p304 = scmp.eq.s32.totalorder %s18, 0
    %p305 = por %p303, %p304
    %p306 = scmp.ne.s32.totalorder %s295, %s298
    %p307 = scmp.eq.s32.totalorder %s23, 1
    %p308 = por %p306, %p307
    %p309 = scmp.ne.s32.totalorder %s298, %s299
    %p310 = scmp.eq.s32.totalorder %s23, 0
    %p311 = por %p309, %p310
    %p312 = scmp.ne.s32.totalorder %s298, %s299
    %p313 = scmp.eq.s32.totalorder %s24, 1
    %p314 = por %p312, %p313
    %p316 = scmp.ne.s32.totalorder %s299, %s315
    %p317 = scmp.eq.s32.totalorder %s24, 0
    %p318 = por %p316, %p317
    %s319 = ssub.s32 %s26, %s33
    %p320 = scmp.eq.s32.totalorder %s319, 0
    %s322 = sadd.s32 %s321, 1
    %s323 = scalar_select %p320, %s321, %s322
    %p326 = pneg %p320
    %p327 = scmp.eq.s32.totalorder %s18, 1
    %p328 = por %p326, %p327
    %p329 = scmp.ne.s32.totalorder %s321, %s324
    %p330 = scmp.eq.s32.totalorder %s18, 0
    %p331 = por %p329, %p330
    %p332 = scmp.ne.s32.totalorder %s321, %s324
    %p333 = scmp.eq.s32.totalorder %s23, 1
    %p334 = por %p332, %p333
    %p335 = scmp.ne.s32.totalorder %s324, %s325
    %p336 = scmp.eq.s32.totalorder %s23, 0
    %p337 = por %p335, %p336
    %p338 = scmp.ne.s32.totalorder %s324, %s325
    %p339 = scmp.eq.s32.totalorder %s24, 1
    %p340 = por %p338, %p339
    %p342 = scmp.ne.s32.totalorder %s325, %s341
    %p343 = scmp.eq.s32.totalorder %s24, 0
    %p344 = por %p342, %p343
    %s345 = ssub.s32 %s25, %s37
    %p346 = scmp.eq.s32.totalorder %s345, 0
    %s348 = sadd.s32 %s347, 1
    %s349 = scalar_select %p346, %s347, %s348
    %p352 = pneg %p346
    %p353 = scmp.eq.s32.totalorder %s18, 1
    %p354 = por %p352, %p353
    %p355 = scmp.ne.s32.totalorder %s347, %s350
    %p356 = scmp.eq.s32.totalorder %s18, 0
    %p357 = por %p355, %p356
    %p358 = scmp.ne.s32.totalorder %s347, %s350
    %p359 = scmp.eq.s32.totalorder %s23, 1
    %p360 = por %p358, %p359
    %p361 = scmp.ne.s32.totalorder %s350, %s351
    %p362 = scmp.eq.s32.totalorder %s23, 0
    %p363 = por %p361, %p362
    %p364 = scmp.ne.s32.totalorder %s350, %s351
    %p365 = scmp.eq.s32.totalorder %s24, 1
    %p366 = por %p364, %p365
    %p368 = scmp.ne.s32.totalorder %s351, %s367
    %p369 = scmp.eq.s32.totalorder %s24, 0
    %p370 = por %p368, %p369
    %p371 = scmp.le.s32.totalorder 1, %s18
    %p372 = scmp.lt.s32.totalorder %s18, 3
    %p373 = pnand %p371, %p372
    %p374 = pneg %p373
    // Predicated region
    $region9: #{vit_forward.4} parent=5 // pred_check
      _
    $region10: #{vit_forward.4} parent=5 // pred_check_branch
      %376 = sbr.rel (%p373) target = $region12
    $region11: #{vit_forward.4} parent=5 // pred_region
      %s377 = ssub.s32 %s18, 1
      // Predicated region
      $region13: #{vit_forward.4} parent=11 // pred_check
        %p378 = pneg %p56
      $region14: #{vit_forward.4} parent=11 // pred_check_branch
        %380 = sbr.rel (%p378) target = $region16
      $region15: #{vit_forward.4} parent=11 // pred_region
        %s381 = smul.u32 5, %s27
        %p382 = scmp.lt.s32.totalorder %s381, 4
        %s383 = scalar_select %p382, %s381, 4
        %s384 = smul.addr %s383, 8
        %s385 = scalar_lea.vmem %s0, %s384
        %s386 = smul.u32 5, %s27
      $region16: #{vit_forward.4} parent=11 // pred_fallthru
        _
      // Predicated region
      $region17: #{vit_forward.4} parent=11 // pred_check
        %p387 = pneg %p77
      $region18: #{vit_forward.4} parent=11 // pred_check_branch
        %389 = sbr.rel (%p387) target = $region20
      $region19: #{vit_forward.4} parent=11 // pred_region
        _
      $region20: #{vit_forward.4} parent=11 // pred_fallthru
        _
    $region12: #{vit_forward.4} parent=5 // pred_fallthru
      _
    %p390 = scmp.lt.s32.totalorder %s18, 2
    // Predicated region
    $region21: #{vit_forward.4} parent=5 // pred_check
      %p391 = pneg %p390
    $region22: #{vit_forward.4} parent=5 // pred_check_branch
      %393 = sbr.rel (%p391) target = $region24
    $region23: #{vit_forward.4} parent=5 // pred_region
      // Predicated region
      $region25: #{vit_forward.4} parent=23 // pred_check
        %p394 = pneg %p97
      $region26: #{vit_forward.4} parent=23 // pred_check_branch
        %396 = sbr.rel (%p394) target = $region28
      $region27: #{vit_forward.4} parent=23 // pred_region
        %p397 = scmp.lt.s32.totalorder %s26, 1
        %s398 = scalar_select %p397, %s26, 1
        %s399 = scalar_lea.vmem %s2, %s398
      $region28: #{vit_forward.4} parent=23 // pred_fallthru
        _
      // Predicated region
      $region29: #{vit_forward.4} parent=23 // pred_check
        %p400 = pneg %p123
      $region30: #{vit_forward.4} parent=23 // pred_check_branch
        %402 = sbr.rel (%p400) target = $region32
      $region31: #{vit_forward.4} parent=23 // pred_region
        %p403 = scmp.lt.s32.totalorder %s26, 1
        %s404 = scalar_select %p403, %s26, 1
        %s405 = scalar_lea.vmem %s3, %s404
      $region32: #{vit_forward.4} parent=23 // pred_fallthru
        _
      // Predicated region
      $region33: #{vit_forward.4} parent=23 // pred_check
        %p406 = pneg %p149
      $region34: #{vit_forward.4} parent=23 // pred_check_branch
        %408 = sbr.rel (%p406) target = $region36
      $region35: #{vit_forward.4} parent=23 // pred_region
        %p409 = scmp.lt.s32.totalorder %s26, 1
        %s410 = scalar_select %p409, %s26, 1
        %s411 = smul.addr %s410, 16
        %s412 = smul.addr %s411, 4
        %s413 = scalar_lea.vmem %s4, %s412
      $region36: #{vit_forward.4} parent=23 // pred_fallthru
        _
      // Predicated region
      $region37: #{vit_forward.4} parent=23 // pred_check
        %p414 = pneg %p175
      $region38: #{vit_forward.4} parent=23 // pred_check_branch
        %416 = sbr.rel (%p414) target = $region40
      $region39: #{vit_forward.4} parent=23 // pred_region
        %p417 = scmp.lt.s32.totalorder %s26, 1
        %s418 = scalar_select %p417, %s26, 1
        %s419 = scalar_lea.vmem %s5, %s418
      $region40: #{vit_forward.4} parent=23 // pred_fallthru
        _
      // Predicated region
      $region41: #{vit_forward.4} parent=23 // pred_check
        %p420 = pneg %p201
      $region42: #{vit_forward.4} parent=23 // pred_check_branch
        %422 = sbr.rel (%p420) target = $region44
      $region43: #{vit_forward.4} parent=23 // pred_region
        %p423 = scmp.lt.s32.totalorder %s26, 1
        %s424 = scalar_select %p423, %s26, 1
        %s425 = scalar_lea.vmem %s6, %s424
      $region44: #{vit_forward.4} parent=23 // pred_fallthru
        _
      // Predicated region
      $region45: #{vit_forward.4} parent=23 // pred_check
        %p426 = pneg %p227
      $region46: #{vit_forward.4} parent=23 // pred_check_branch
        %428 = sbr.rel (%p426) target = $region48
      $region47: #{vit_forward.4} parent=23 // pred_region
        %p429 = scmp.lt.s32.totalorder %s26, 1
        %s430 = scalar_select %p429, %s26, 1
        %s431 = scalar_lea.vmem %s7, %s430
      $region48: #{vit_forward.4} parent=23 // pred_fallthru
        _
      // Predicated region
      $region49: #{vit_forward.4} parent=23 // pred_check
        %p432 = pneg %p253
      $region50: #{vit_forward.4} parent=23 // pred_check_branch
        %434 = sbr.rel (%p432) target = $region52
      $region51: #{vit_forward.4} parent=23 // pred_region
        %p435 = scmp.lt.s32.totalorder %s26, 1
        %s436 = scalar_select %p435, %s26, 1
        %s437 = smul.addr %s436, 16
        %s438 = smul.addr %s437, 4
        %s439 = scalar_lea.vmem %s8, %s438
      $region52: #{vit_forward.4} parent=23 // pred_fallthru
        _
      // Predicated region
      $region53: #{vit_forward.4} parent=23 // pred_check
        %p440 = pneg %p279
      $region54: #{vit_forward.4} parent=23 // pred_check_branch
        %442 = sbr.rel (%p440) target = $region56
      $region55: #{vit_forward.4} parent=23 // pred_region
        %p443 = scmp.lt.s32.totalorder %s26, 1
        %s444 = scalar_select %p443, %s26, 1
        %s445 = scalar_lea.vmem %s9, %s444
      $region56: #{vit_forward.4} parent=23 // pred_fallthru
        _
      // Predicated region
      $region57: #{vit_forward.4} parent=23 // pred_check
        %p446 = pneg %p305
      $region58: #{vit_forward.4} parent=23 // pred_check_branch
        %448 = sbr.rel (%p446) target = $region60
      $region59: #{vit_forward.4} parent=23 // pred_region
        %p449 = scmp.lt.s32.totalorder %s26, 1
        %s450 = scalar_select %p449, %s26, 1
        %s451 = smul.addr %s450, 16
        %s452 = smul.addr %s451, 4
        %s453 = scalar_lea.vmem %s10, %s452
      $region60: #{vit_forward.4} parent=23 // pred_fallthru
        _
      // Predicated region
      $region61: #{vit_forward.4} parent=23 // pred_check
        %p454 = pneg %p331
      $region62: #{vit_forward.4} parent=23 // pred_check_branch
        %456 = sbr.rel (%p454) target = $region64
      $region63: #{vit_forward.4} parent=23 // pred_region
        %p457 = scmp.lt.s32.totalorder %s26, 1
        %s458 = scalar_select %p457, %s26, 1
        %s459 = scalar_lea.vmem %s11, %s458
      $region64: #{vit_forward.4} parent=23 // pred_fallthru
        _
    $region24: #{vit_forward.4} parent=5 // pred_fallthru
      _
    %p460 = scmp.le.s32.totalorder 1, %s18
    %p461 = scmp.lt.s32.totalorder %s18, 3
    %p462 = pnand %p460, %p461
    %p463 = pneg %p462
    // Predicated region
    $region65: #{vit_forward.4} parent=5 // pred_check
      _
    $region66: #{vit_forward.4} parent=5 // pred_check_branch
      %465 = sbr.rel (%p462) target = $region68
    $region67: #{vit_forward.4} parent=5 // pred_region
      %s466 = ssub.s32 %s18, 1
      %s467 = smul.u32 5, %s27
      %p468 = scmp.lt.s32.totalorder %s467, 4
      %s469 = scalar_select %p468, %s467, 4
      %s470 = smul.addr %s469, 8
      %s471 = scalar_lea.vmem %s0, %s470
      %p472 = pneg %p56
      %p473 = pneg %p53
      %p474 = pneg %p77
      %p475 = pneg %p74
      %p476 = scmp.lt.s32.totalorder %s28, 1
      %s477 = scalar_select %p476, %s28, 1
      %s478 = scalar_lea.vmem %s2, %s477
      %p479 = pneg %p103
      %p480 = pneg %p100
      %p481 = scmp.lt.s32.totalorder %s28, 1
      %s482 = scalar_select %p481, %s28, 1
      %s483 = scalar_lea.vmem %s3, %s482
      %p484 = pneg %p129
      %p485 = pneg %p126
      %p486 = scmp.lt.s32.totalorder %s28, 1
      %s487 = scalar_select %p486, %s28, 1
      %s488 = smul.addr %s487, 16
      %s489 = smul.addr %s488, 4
      %s490 = scalar_lea.vmem %s4, %s489
      %p491 = pneg %p155
      %p492 = pneg %p152
      %p493 = scmp.lt.s32.totalorder %s28, 1
      %s494 = scalar_select %p493, %s28, 1
      %s495 = scalar_lea.vmem %s5, %s494
      %p496 = pneg %p181
      %p497 = pneg %p178
      %p498 = scmp.lt.s32.totalorder %s28, 1
      %s499 = scalar_select %p498, %s28, 1
      %s500 = scalar_lea.vmem %s6, %s499
      %p501 = pneg %p207
      %p502 = pneg %p204
      %p503 = scmp.lt.s32.totalorder %s28, 1
      %s504 = scalar_select %p503, %s28, 1
      %s505 = scalar_lea.vmem %s7, %s504
      %p506 = pneg %p233
      %p507 = pneg %p230
      %p508 = scmp.lt.s32.totalorder %s28, 1
      %s509 = scalar_select %p508, %s28, 1
      %s510 = smul.addr %s509, 16
      %s511 = smul.addr %s510, 4
      %s512 = scalar_lea.vmem %s8, %s511
      %p513 = pneg %p259
      %p514 = pneg %p256
      %p515 = scmp.lt.s32.totalorder %s28, 1
      %s516 = scalar_select %p515, %s28, 1
      %s517 = scalar_lea.vmem %s9, %s516
      %p518 = pneg %p285
      %p519 = pneg %p282
      %p520 = scmp.lt.s32.totalorder %s28, 1
      %s521 = scalar_select %p520, %s28, 1
      %s522 = smul.addr %s521, 16
      %s523 = smul.addr %s522, 4
      %s524 = scalar_lea.vmem %s10, %s523
      %p525 = pneg %p311
      %p526 = pneg %p308
      %p527 = scmp.lt.s32.totalorder %s28, 1
      %s528 = scalar_select %p527, %s28, 1
      %s529 = scalar_lea.vmem %s11, %s528
      %p530 = pneg %p337
      %p531 = pneg %p334
      %p532 = pneg %p363
      %p533 = pneg %p360
      %s534 = smul.u32 5, %s27
      %p535 = scmp.lt.s32.totalorder %s534, 4
      %s536 = scalar_select %p535, %s534, 4
      %s537 = smul.addr %s536, 8
      %s538 = scalar_lea.vmem %s12, %s537
      %s539 = smul.u32 5, %s27
      %p540 = scmp.lt.s32.totalorder %s539, 4
      %s541 = scalar_select %p540, %s539, 4
      %s542 = smul.addr %s541, 8
      %s543 = scalar_lea.vmem %s0, %s542
      %s544 = smul.u32 5, %s27
      %p545 = scmp.lt.s32.totalorder %s28, 1
      %s546 = scalar_select %p545, %s28, 1
      %s547 = scalar_lea.vmem %s2, %s546
      %p548 = scmp.lt.s32.totalorder %s28, 1
      %s549 = scalar_select %p548, %s28, 1
      %s550 = scalar_lea.vmem %s3, %s549
      %p551 = scmp.lt.s32.totalorder %s28, 1
      %s552 = scalar_select %p551, %s28, 1
      %s553 = smul.addr %s552, 16
      %s554 = smul.addr %s553, 4
      %s555 = scalar_lea.vmem %s4, %s554
      %p556 = scmp.lt.s32.totalorder %s28, 1
      %s557 = scalar_select %p556, %s28, 1
      %s558 = scalar_lea.vmem %s5, %s557
      %p559 = scmp.lt.s32.totalorder %s28, 1
      %s560 = scalar_select %p559, %s28, 1
      %s561 = scalar_lea.vmem %s6, %s560
      %p562 = scmp.lt.s32.totalorder %s28, 1
      %s563 = scalar_select %p562, %s28, 1
      %s564 = scalar_lea.vmem %s7, %s563
      %p565 = scmp.lt.s32.totalorder %s28, 1
      %s566 = scalar_select %p565, %s28, 1
      %s567 = smul.addr %s566, 16
      %s568 = smul.addr %s567, 4
      %s569 = scalar_lea.vmem %s8, %s568
      %p570 = scmp.lt.s32.totalorder %s28, 1
      %s571 = scalar_select %p570, %s28, 1
      %s572 = scalar_lea.vmem %s9, %s571
      %p573 = scmp.lt.s32.totalorder %s28, 1
      %s574 = scalar_select %p573, %s28, 1
      %s575 = smul.addr %s574, 16
      %s576 = smul.addr %s575, 4
      %s577 = scalar_lea.vmem %s10, %s576
      %p578 = scmp.lt.s32.totalorder %s28, 1
      %s579 = scalar_select %p578, %s28, 1
      %s580 = scalar_lea.vmem %s11, %s579
      %s581 = smul.u32 5, %s27
      %p582 = scmp.lt.s32.totalorder %s581, 4
      %s583 = scalar_select %p582, %s581, 4
      %s584 = smul.addr %s583, 8
      %s585 = scalar_lea.vmem %s12, %s584
      %s586 = smul.u32 5, %s27
      %p588 = scmp.eq.s32.totalorder %s28, 0
      // Predicated region
      $region69: #{vit_forward.4} parent=67 // pred_check
        %p589 = pneg %p588
      $region70: #{vit_forward.4} parent=67 // pred_check_branch
        %591 = sbr.rel (%p589) target = $region72
      $region71: #{vit_forward.4} parent=67 // pred_region
        %v592 = vld [vmem:[%s543] sm:$0xff]
        %v593 = vld [vmem:[%s543 + $0x8] sm:$0xff]
        %v594 = vld [vmem:[%s543 + $0x10] sm:$0xff]
        %v595 = vld [vmem:[%s543 + $0x18] sm:$0xff]
        %v596 = vld [vmem:[%s543 + $0x20] sm:$0xff]
        %597 = vst [vmem:[%s585] sm:$0xff] %v592
        %598 = vst [vmem:[%s585 + $0x8] sm:$0xff] %v593
        %599 = vst [vmem:[%s585 + $0x10] sm:$0xff] %v594
        %600 = vst [vmem:[%s585 + $0x18] sm:$0xff] %v595
        %601 = vst [vmem:[%s585 + $0x20] sm:$0xff] %v596
      $region72: #{vit_forward.4} parent=67 // pred_fallthru
        _
      %v602 = vld [vmem:[%s585] sm:$0xff]
      %v603 = vld [vmem:[%s585 + $0x8] sm:$0xff]
      %v604 = vld [vmem:[%s585 + $0x10] sm:$0xff]
      %v605 = vld [vmem:[%s585 + $0x18] sm:$0xff]
      %v606 = vld [vmem:[%s585 + $0x20] sm:$0xff]
      %v607 = vld [vmem:[%s1] sm:$0x1]
      %v608 = vld [vmem:[%s547] sm:$0x1]
      %v609 = vld [vmem:[%s550] sm:$0x1]
      %610 = vadd.xlane.f32.xlu0 %v602
      %v611 = vpop.xlane.xlu0 %610
      %612 = vadd.xlane.f32.xlu0 %v603
      %v613 = vpop.xlane.xlu0 %612
      %614 = vadd.xlane.f32.xlu0 %v604
      %v615 = vpop.xlane.xlu0 %614
      %616 = vadd.xlane.f32.xlu0 %v605
      %v617 = vpop.xlane.xlu0 %616
      %618 = vadd.xlane.f32.xlu0 %v606
      %v619 = vpop.xlane.xlu0 %618
      %v620 = vmul.f32 %v611, 0.03125
      %v621 = vmul.f32 %v613, 0.03125
      %v622 = vmul.f32 %v615, 0.03125
      %v623 = vmul.f32 %v617, 0.03125
      %v624 = vmul.f32 %v619, 0.03125
      %v625 = vsub.f32 %v602, %v620
      %v626 = vsub.f32 %v603, %v621
      %v627 = vsub.f32 %v604, %v622
      %v628 = vsub.f32 %v605, %v623
      %v629 = vsub.f32 %v606, %v624
      %v631 = vlaneseq
      %v632 = vshrl.u32 %v631, 7
      %v633 = vsub.s32 0, %v632
      %v634 = vrot.slane %v607, %v633
      %v636 = vmul.f32 %v625, %v634
      %v637 = vmul.f32 %v626, %v634
      %v638 = vmul.f32 %v627, %v634
      %v639 = vmul.f32 %v628, %v634
      %v640 = vmul.f32 %v629, %v634
      %v641 = vmul.f32 %v636, %v636
      %v642 = vmul.f32 %v637, %v637
      %v643 = vmul.f32 %v638, %v638
      %v644 = vmul.f32 %v639, %v639
      %v645 = vmul.f32 %v640, %v640
      %646 = vadd.xlane.f32.xlu0 %v641
      %v647 = vpop.xlane.xlu0 %646
      %648 = vadd.xlane.f32.xlu0 %v642
      %v649 = vpop.xlane.xlu0 %648
      %650 = vadd.xlane.f32.xlu0 %v643
      %v651 = vpop.xlane.xlu0 %650
      %652 = vadd.xlane.f32.xlu0 %v644
      %v653 = vpop.xlane.xlu0 %652
      %654 = vadd.xlane.f32.xlu0 %v645
      %v655 = vpop.xlane.xlu0 %654
      %v656 = vmul.f32 %v647, 0.03125
      %v657 = vmul.f32 %v649, 0.03125
      %v658 = vmul.f32 %v651, 0.03125
      %v659 = vmul.f32 %v653, 0.03125
      %v660 = vmul.f32 %v655, 0.03125
      %v661 = vadd.f32 %v656, 1e-06
      %v662 = vadd.f32 %v657, 1e-06
      %v663 = vadd.f32 %v658, 1e-06
      %v664 = vadd.f32 %v659, 1e-06
      %v665 = vadd.f32 %v660, 1e-06
      %v666 = vrsqrt.pop %v661
      %v667 = vrsqrt.pop %v662
      %v668 = vrsqrt.pop %v663
      %v669 = vrsqrt.pop %v664
      %v670 = vrsqrt.pop %v665
      %v671 = vmul.f32 %v636, %v666
      %v672 = vmul.f32 %v637, %v667
      %v673 = vmul.f32 %v638, %v668
      %v674 = vmul.f32 %v639, %v669
      %v675 = vmul.f32 %v640, %v670
      %v677 = vlaneseq
      %v678 = vshrl.u32 %v677, 7
      %v679 = vsub.s32 0, %v678
      %v680 = vrot.slane %v608, %v679
      %v682 = vmul.f32 %v671, %v680
      %v683 = vmul.f32 %v672, %v680
      %v684 = vmul.f32 %v673, %v680
      %v685 = vmul.f32 %v674, %v680
      %v686 = vmul.f32 %v675, %v680
      %v688 = vlaneseq
      %v689 = vshrl.u32 %v688, 7
      %v690 = vsub.s32 0, %v689
      %v691 = vrot.slane %v609, %v690
      %v693 = vadd.f32 %v682, %v691
      %v694 = vadd.f32 %v683, %v691
      %v695 = vadd.f32 %v684, %v691
      %v696 = vadd.f32 %v685, %v691
      %v697 = vadd.f32 %v686, %v691
      %v698 = vpack.c.bf16 %v694, %v693
      %v699 = vpack.c.bf16 %v696, %v695
      %v700 = vpack.c.bf16 %v697, %v697
      %v701 = vld [vmem:[%s555] sm:$0xf]
      %v702 = vld [vmem:[%s555 + $0x4] sm:$0xf]
      %v703 = vld [vmem:[%s555 + $0x8] sm:$0xf]
      %v704 = vld [vmem:[%s555 + $0xc] sm:$0xf]
      %v705 = vld [vmem:[%s555 + $0x10] sm:$0xf]
      %v706 = vld [vmem:[%s555 + $0x14] sm:$0xf]
      %v707 = vld [vmem:[%s555 + $0x18] sm:$0xf]
      %v708 = vld [vmem:[%s555 + $0x1c] sm:$0xf]
      %v709 = vld [vmem:[%s555 + $0x20] sm:$0xf]
      %v710 = vld [vmem:[%s555 + $0x24] sm:$0xf]
      %v711 = vld [vmem:[%s555 + $0x28] sm:$0xf]
      %v712 = vld [vmem:[%s555 + $0x2c] sm:$0xf]
      %v713 = vld [vmem:[%s555 + $0x30] sm:$0xf]
      %v714 = vld [vmem:[%s555 + $0x34] sm:$0xf]
      %v715 = vld [vmem:[%s555 + $0x38] sm:$0xf]
      %v716 = vld [vmem:[%s555 + $0x3c] sm:$0xf]
      %v717 = vld [vmem:[%s558] sm:$0x1]
      %v719 = vlaneseq
      %v720 = vshrl.u32 %v719, 7
      %v721 = vsub.s32 0, %v720
      %v722 = vrot.slane %v717, %v721
      %v740 = vunpack.c.l.b16 %v701
      %v741 = vunpack.c.l.b16 %v702
      %v742 = vunpack.c.l.b16 %v703
      %v743 = vunpack.c.l.b16 %v704
      %v744 = vunpack.c.l.b16 %v705
      %v745 = vunpack.c.l.b16 %v706
      %v746 = vunpack.c.l.b16 %v707
      %v747 = vunpack.c.l.b16 %v708
      %v748 = vunpack.c.l.b16 %v709
      %v749 = vunpack.c.l.b16 %v710
      %v750 = vunpack.c.l.b16 %v711
      %v751 = vunpack.c.l.b16 %v712
      %v752 = vunpack.c.l.b16 %v713
      %v753 = vunpack.c.l.b16 %v714
      %v754 = vunpack.c.l.b16 %v715
      %v755 = vunpack.c.l.b16 %v716
      %v756 = vpack.c.b16 %v741, %v740
      %v757 = vpack.c.b16 %v743, %v742
      %v758 = vpack.c.b16 %v745, %v744
      %v759 = vpack.c.b16 %v747, %v746
      %v760 = vpack.c.b16 %v749, %v748
      %v761 = vpack.c.b16 %v751, %v750
      %v762 = vpack.c.b16 %v753, %v752
      %v763 = vpack.c.b16 %v755, %v754
      %772 = vmatprep.subr.bf16.mxu0 0
      %773 = vmatpush1.bf16.msra.mxu0 %v763
      %774 = vmatprep.subr.bf16.mxu0 0
      %775 = vmatpush1.bf16.msra.mxu0 %v762
      %776 = vmatprep.subr.bf16.mxu0 0
      %777 = vmatpush1.bf16.msra.mxu0 %v761
      %778 = vmatprep.subr.bf16.mxu0 0
      %779 = vmatpush1.bf16.msra.mxu0 %v760
      %780 = vmatprep.subr.bf16.mxu0 0
      %781 = vmatpush1.bf16.msra.mxu0 %v759
      %782 = vmatprep.subr.bf16.mxu0 0
      %783 = vmatpush1.bf16.msra.mxu0 %v758
      %784 = vmatprep.subr.bf16.mxu0 0
      %785 = vmatpush1.bf16.msra.mxu0 %v757
      %786 = vmatprep.subr.bf16.mxu0 0
      %787 = vmatpush1.bf16.msra.mxu0 %v756
      %788 = vmatprep.subr.bf16.mxu0 0
      %789 = vmatpush2.bf16.msra.mxu0 0
      %790 = vmatprep.subr.bf16.mxu0 0
      %791 = vmatpush2.bf16.msra.mxu0 0
      %792 = vmatprep.subr.bf16.mxu0 0
      %793 = vmatpush2.bf16.msra.mxu0 0
      %794 = vmatprep.subr.bf16.mxu0 0
      %795 = vmatpush2.bf16.msra.mxu0 0
      %796 = vmatprep.subr.bf16.mxu0 0
      %797 = vmatpush2.bf16.msra.mxu0 0
      %798 = vmatprep.subr.bf16.mxu0 0
      %799 = vmatpush2.bf16.msra.mxu0 0
      %800 = vmatprep.subr.bf16.mxu0 0
      %801 = vmatpush2.bf16.msra.mxu0 0
      %802 = vmatprep.subr.bf16.mxu0 0
      %803 = vmatpush2.bf16.msra.mxu0 0
      %804 = vmatprep.mubr.bf16.mxu0 0
      %805 = vmatmul.mubr.bf16.gmra.mxu0 %v698
      %v806 = vpop.f32.mrf.mxu0
      %v807 = vadd.f32 %v722, %v806
      %v808 = vpop.f32.mrf.mxu0
      %v809 = vpop.f32.mrf.mxu0
      %v810 = vadd.f32 %v722, %v809
      %v811 = vpop.f32.mrf.mxu0
      %812 = vmatprep.mubr.bf16.mxu0 0
      %813 = vmatmul.mubr.bf16.gmra.mxu0 %v699
      %v814 = vpop.f32.mrf.mxu0
      %v815 = vadd.f32 %v722, %v814
      %v816 = vpop.f32.mrf.mxu0
      %v817 = vpop.f32.mrf.mxu0
      %v818 = vadd.f32 %v722, %v817
      %v819 = vpop.f32.mrf.mxu0
      %820 = vmatprep.mubr.bf16.mxu0 0
      %821 = vmatmul.mubr.bf16.gmra.mxu0 %v700
      %v822 = vpop.f32.mrf.mxu0
      %v823 = vadd.f32 %v722, %v822
      %v824 = vpop.f32.mrf.mxu0
      %v825 = vpop.f32.mrf.mxu0
      %v826 = vpop.f32.mrf.mxu0
      %827 = vdwg.mxu0
      %v828 = vadd.f32 %v602, %v807
      %v829 = vadd.f32 %v603, %v810
      %v830 = vadd.f32 %v604, %v815
      %v831 = vadd.f32 %v605, %v818
      %v832 = vadd.f32 %v606, %v823
      %v833 = vld [vmem:[%s561] sm:$0x1]
      %v834 = vld [vmem:[%s564] sm:$0x1]
      %835 = vadd.xlane.f32.xlu0 %v828
      %v836 = vpop.xlane.xlu0 %835
      %837 = vadd.xlane.f32.xlu0 %v829
      %v838 = vpop.xlane.xlu0 %837
      %839 = vadd.xlane.f32.xlu0 %v830
      %v840 = vpop.xlane.xlu0 %839
      %841 = vadd.xlane.f32.xlu0 %v831
      %v842 = vpop.xlane.xlu0 %841
      %843 = vadd.xlane.f32.xlu0 %v832
      %v844 = vpop.xlane.xlu0 %843
      %v845 = vmul.f32 %v836, 0.03125
      %v846 = vmul.f32 %v838, 0.03125
      %v847 = vmul.f32 %v840, 0.03125
      %v848 = vmul.f32 %v842, 0.03125
      %v849 = vmul.f32 %v844, 0.03125
      %v850 = vsub.f32 %v828, %v845
      %v851 = vsub.f32 %v829, %v846
      %v852 = vsub.f32 %v830, %v847
      %v853 = vsub.f32 %v831, %v848
      %v854 = vsub.f32 %v832, %v849
      %v855 = vmul.f32 %v850, %v634
      %v856 = vmul.f32 %v851, %v634
      %v857 = vmul.f32 %v852, %v634
      %v858 = vmul.f32 %v853, %v634
      %v859 = vmul.f32 %v854, %v634
      %v860 = vmul.f32 %v855, %v855
      %v861 = vmul.f32 %v856, %v856
      %v862 = vmul.f32 %v857, %v857
      %v863 = vmul.f32 %v858, %v858
      %v864 = vmul.f32 %v859, %v859
      %865 = vadd.xlane.f32.xlu0 %v860
      %v866 = vpop.xlane.xlu0 %865
      %867 = vadd.xlane.f32.xlu0 %v861
      %v868 = vpop.xlane.xlu0 %867
      %869 = vadd.xlane.f32.xlu0 %v862
      %v870 = vpop.xlane.xlu0 %869
      %871 = vadd.xlane.f32.xlu0 %v863
      %v872 = vpop.xlane.xlu0 %871
      %873 = vadd.xlane.f32.xlu0 %v864
      %v874 = vpop.xlane.xlu0 %873
      %v875 = vmul.f32 %v866, 0.03125
      %v876 = vmul.f32 %v868, 0.03125
      %v877 = vmul.f32 %v870, 0.03125
      %v878 = vmul.f32 %v872, 0.03125
      %v879 = vmul.f32 %v874, 0.03125
      %v880 = vadd.f32 %v875, 1e-06
      %v881 = vadd.f32 %v876, 1e-06
      %v882 = vadd.f32 %v877, 1e-06
      %v883 = vadd.f32 %v878, 1e-06
      %v884 = vadd.f32 %v879, 1e-06
      %v885 = vrsqrt.pop %v880
      %v886 = vrsqrt.pop %v881
      %v887 = vrsqrt.pop %v882
      %v888 = vrsqrt.pop %v883
      %v889 = vrsqrt.pop %v884
      %v890 = vmul.f32 %v855, %v885
      %v891 = vmul.f32 %v856, %v886
      %v892 = vmul.f32 %v857, %v887
      %v893 = vmul.f32 %v858, %v888
      %v894 = vmul.f32 %v859, %v889
      %v896 = vlaneseq
      %v897 = vshrl.u32 %v896, 7
      %v898 = vsub.s32 0, %v897
      %v899 = vrot.slane %v833, %v898
      %v901 = vmul.f32 %v890, %v899
      %v902 = vmul.f32 %v891, %v899
      %v903 = vmul.f32 %v892, %v899
      %v904 = vmul.f32 %v893, %v899
      %v905 = vmul.f32 %v894, %v899
      %v907 = vlaneseq
      %v908 = vshrl.u32 %v907, 7
      %v909 = vsub.s32 0, %v908
      %v910 = vrot.slane %v834, %v909
      %v912 = vadd.f32 %v901, %v910
      %v913 = vadd.f32 %v902, %v910
      %v914 = vadd.f32 %v903, %v910
      %v915 = vadd.f32 %v904, %v910
      %v916 = vadd.f32 %v905, %v910
      %v917 = vpack.c.bf16 %v913, %v912
      %v918 = vpack.c.bf16 %v915, %v914
      %v919 = vpack.c.bf16 %v916, %v916
      %v920 = vld [vmem:[%s569] sm:$0xf]
      %v921 = vld [vmem:[%s569 + $0x4] sm:$0xf]
      %v922 = vld [vmem:[%s569 + $0x8] sm:$0xf]
      %v923 = vld [vmem:[%s569 + $0xc] sm:$0xf]
      %v924 = vld [vmem:[%s569 + $0x10] sm:$0xf]
      %v925 = vld [vmem:[%s569 + $0x14] sm:$0xf]
      %v926 = vld [vmem:[%s569 + $0x18] sm:$0xf]
      %v927 = vld [vmem:[%s569 + $0x1c] sm:$0xf]
      %v928 = vld [vmem:[%s569 + $0x20] sm:$0xf]
      %v929 = vld [vmem:[%s569 + $0x24] sm:$0xf]
      %v930 = vld [vmem:[%s569 + $0x28] sm:$0xf]
      %v931 = vld [vmem:[%s569 + $0x2c] sm:$0xf]
      %v932 = vld [vmem:[%s569 + $0x30] sm:$0xf]
      %v933 = vld [vmem:[%s569 + $0x34] sm:$0xf]
      %v934 = vld [vmem:[%s569 + $0x38] sm:$0xf]
      %v935 = vld [vmem:[%s569 + $0x3c] sm:$0xf]
      %v936 = vld [vmem:[%s572] sm:$0x1]
      %v938 = vlaneseq
      %v939 = vshrl.u32 %v938, 7
      %v940 = vsub.s32 0, %v939
      %v941 = vrot.slane %v936, %v940
      %v959 = vunpack.c.l.b16 %v920
      %v960 = vunpack.c.l.b16 %v921
      %v961 = vunpack.c.l.b16 %v922
      %v962 = vunpack.c.l.b16 %v923
      %v963 = vunpack.c.l.b16 %v924
      %v964 = vunpack.c.l.b16 %v925
      %v965 = vunpack.c.l.b16 %v926
      %v966 = vunpack.c.l.b16 %v927
      %v967 = vunpack.c.l.b16 %v928
      %v968 = vunpack.c.l.b16 %v929
      %v969 = vunpack.c.l.b16 %v930
      %v970 = vunpack.c.l.b16 %v931
      %v971 = vunpack.c.l.b16 %v932
      %v972 = vunpack.c.l.b16 %v933
      %v973 = vunpack.c.l.b16 %v934
      %v974 = vunpack.c.l.b16 %v935
      %v975 = vpack.c.b16 %v960, %v959
      %v976 = vpack.c.b16 %v962, %v961
      %v977 = vpack.c.b16 %v964, %v963
      %v978 = vpack.c.b16 %v966, %v965
      %v979 = vpack.c.b16 %v968, %v967
      %v980 = vpack.c.b16 %v970, %v969
      %v981 = vpack.c.b16 %v972, %v971
      %v982 = vpack.c.b16 %v974, %v973
      %991 = vmatprep.subr.bf16.mxu0 0
      %992 = vmatpush1.bf16.msra.mxu0 %v982
      %993 = vmatprep.subr.bf16.mxu0 0
      %994 = vmatpush1.bf16.msra.mxu0 %v981
      %995 = vmatprep.subr.bf16.mxu0 0
      %996 = vmatpush1.bf16.msra.mxu0 %v980
      %997 = vmatprep.subr.bf16.mxu0 0
      %998 = vmatpush1.bf16.msra.mxu0 %v979
      %999 = vmatprep.subr.bf16.mxu0 0
      %1000 = vmatpush1.bf16.msra.mxu0 %v978
      %1001 = vmatprep.subr.bf16.mxu0 0
      %1002 = vmatpush1.bf16.msra.mxu0 %v977
      %1003 = vmatprep.subr.bf16.mxu0 0
      %1004 = vmatpush1.bf16.msra.mxu0 %v976
      %1005 = vmatprep.subr.bf16.mxu0 0
      %1006 = vmatpush1.bf16.msra.mxu0 %v975
      %1007 = vmatprep.subr.bf16.mxu0 0
      %1008 = vmatpush2.bf16.msra.mxu0 0
      %1009 = vmatprep.subr.bf16.mxu0 0
      %1010 = vmatpush2.bf16.msra.mxu0 0
      %1011 = vmatprep.subr.bf16.mxu0 0
      %1012 = vmatpush2.bf16.msra.mxu0 0
      %1013 = vmatprep.subr.bf16.mxu0 0
      %1014 = vmatpush2.bf16.msra.mxu0 0
      %1015 = vmatprep.subr.bf16.mxu0 0
      %1016 = vmatpush2.bf16.msra.mxu0 0
      %1017 = vmatprep.subr.bf16.mxu0 0
      %1018 = vmatpush2.bf16.msra.mxu0 0
      %1019 = vmatprep.subr.bf16.mxu0 0
      %1020 = vmatpush2.bf16.msra.mxu0 0
      %1021 = vmatprep.subr.bf16.mxu0 0
      %1022 = vmatpush2.bf16.msra.mxu0 0
      %1023 = vmatprep.mubr.bf16.mxu0 0
      %1024 = vmatmul.mubr.bf16.gmra.mxu0 %v917
      %v1025 = vpop.f32.mrf.mxu0
      %v1026 = vadd.f32 %v941, %v1025
      %v1027 = vpop.f32.mrf.mxu0
      %v1028 = vpop.f32.mrf.mxu0
      %v1029 = vadd.f32 %v941, %v1028
      %v1030 = vpop.f32.mrf.mxu0
      %1031 = vmatprep.mubr.bf16.mxu0 0
      %1032 = vmatmul.mubr.bf16.gmra.mxu0 %v918
      %v1033 = vpop.f32.mrf.mxu0
      %v1034 = vadd.f32 %v941, %v1033
      %v1035 = vpop.f32.mrf.mxu0
      %v1036 = vpop.f32.mrf.mxu0
      %v1037 = vadd.f32 %v941, %v1036
      %v1038 = vpop.f32.mrf.mxu0
      %1039 = vmatprep.mubr.bf16.mxu0 0
      %1040 = vmatmul.mubr.bf16.gmra.mxu0 %v919
      %v1041 = vpop.f32.mrf.mxu0
      %v1042 = vadd.f32 %v941, %v1041
      %v1043 = vpop.f32.mrf.mxu0
      %v1044 = vpop.f32.mrf.mxu0
      %v1045 = vpop.f32.mrf.mxu0
      %1046 = vdwg.mxu0
      %v1047 = vmul.f32 %v1026, 0.5
      %v1048 = vmul.f32 %v1029, 0.5
      %v1049 = vmul.f32 %v1034, 0.5
      %v1050 = vmul.f32 %v1037, 0.5
      %v1051 = vmul.f32 %v1042, 0.5
      %v1052 = vmul.f32 %v1026, 0.70710677
      %v1053 = vmul.f32 %v1029, 0.70710677
      %v1054 = vmul.f32 %v1034, 0.70710677
      %v1055 = vmul.f32 %v1037, 0.70710677
      %v1056 = vmul.f32 %v1042, 0.70710677
      %v1057 = verf.f32.pop %v1052
      %v1058 = verf.f32.pop %v1053
      %v1059 = verf.f32.pop %v1054
      %v1060 = verf.f32.pop %v1055
      %v1061 = verf.f32.pop %v1056
      %v1062 = vadd.f32 %v1057, 1.0
      %v1063 = vadd.f32 %v1058, 1.0
      %v1064 = vadd.f32 %v1059, 1.0
      %v1065 = vadd.f32 %v1060, 1.0
      %v1066 = vadd.f32 %v1061, 1.0
      %v1067 = vmul.f32 %v1047, %v1062
      %v1068 = vmul.f32 %v1048, %v1063
      %v1069 = vmul.f32 %v1049, %v1064
      %v1070 = vmul.f32 %v1050, %v1065
      %v1071 = vmul.f32 %v1051, %v1066
      %v1072 = vpack.c.bf16 %v1068, %v1067
      %v1073 = vpack.c.bf16 %v1070, %v1069
      %v1074 = vpack.c.bf16 %v1071, %v1071
      %v1075 = vld [vmem:[%s577] sm:$0xf]
      %v1076 = vld [vmem:[%s577 + $0x4] sm:$0xf]
      %v1077 = vld [vmem:[%s577 + $0x8] sm:$0xf]
      %v1078 = vld [vmem:[%s577 + $0xc] sm:$0xf]
      %v1079 = vld [vmem:[%s577 + $0x10] sm:$0xf]
      %v1080 = vld [vmem:[%s577 + $0x14] sm:$0xf]
      %v1081 = vld [vmem:[%s577 + $0x18] sm:$0xf]
      %v1082 = vld [vmem:[%s577 + $0x1c] sm:$0xf]
      %v1083 = vld [vmem:[%s577 + $0x20] sm:$0xf]
      %v1084 = vld [vmem:[%s577 + $0x24] sm:$0xf]
      %v1085 = vld [vmem:[%s577 + $0x28] sm:$0xf]
      %v1086 = vld [vmem:[%s577 + $0x2c] sm:$0xf]
      %v1087 = vld [vmem:[%s577 + $0x30] sm:$0xf]
      %v1088 = vld [vmem:[%s577 + $0x34] sm:$0xf]
      %v1089 = vld [vmem:[%s577 + $0x38] sm:$0xf]
      %v1090 = vld [vmem:[%s577 + $0x3c] sm:$0xf]
      %v1091 = vld [vmem:[%s580] sm:$0x1]
      %v1093 = vlaneseq
      %v1094 = vshrl.u32 %v1093, 7
      %v1095 = vsub.s32 0, %v1094
      %v1096 = vrot.slane %v1091, %v1095
      %v1114 = vunpack.c.l.b16 %v1075
      %v1115 = vunpack.c.l.b16 %v1076
      %v1116 = vunpack.c.l.b16 %v1077
      %v1117 = vunpack.c.l.b16 %v1078
      %v1118 = vunpack.c.l.b16 %v1079
      %v1119 = vunpack.c.l.b16 %v1080
      %v1120 = vunpack.c.l.b16 %v1081
      %v1121 = vunpack.c.l.b16 %v1082
      %v1122 = vunpack.c.l.b16 %v1083
      %v1123 = vunpack.c.l.b16 %v1084
      %v1124 = vunpack.c.l.b16 %v1085
      %v1125 = vunpack.c.l.b16 %v1086
      %v1126 = vunpack.c.l.b16 %v1087
      %v1127 = vunpack.c.l.b16 %v1088
      %v1128 = vunpack.c.l.b16 %v1089
      %v1129 = vunpack.c.l.b16 %v1090
      %v1130 = vpack.c.b16 %v1115, %v1114
      %v1131 = vpack.c.b16 %v1117, %v1116
      %v1132 = vpack.c.b16 %v1119, %v1118
      %v1133 = vpack.c.b16 %v1121, %v1120
      %v1134 = vpack.c.b16 %v1123, %v1122
      %v1135 = vpack.c.b16 %v1125, %v1124
      %v1136 = vpack.c.b16 %v1127, %v1126
      %v1137 = vpack.c.b16 %v1129, %v1128
      %1146 = vmatprep.subr.bf16.mxu0 0
      %1147 = vmatpush1.bf16.msra.mxu0 %v1137
      %1148 = vmatprep.subr.bf16.mxu0 0
      %1149 = vmatpush1.bf16.msra.mxu0 %v1136
      %1150 = vmatprep.subr.bf16.mxu0 0
      %1151 = vmatpush1.bf16.msra.mxu0 %v1135
      %1152 = vmatprep.subr.bf16.mxu0 0
      %1153 = vmatpush1.bf16.msra.mxu0 %v1134
      %1154 = vmatprep.subr.bf16.mxu0 0
      %1155 = vmatpush1.bf16.msra.mxu0 %v1133
      %1156 = vmatprep.subr.bf16.mxu0 0
      %1157 = vmatpush1.bf16.msra.mxu0 %v1132
      %1158 = vmatprep.subr.bf16.mxu0 0
      %1159 = vmatpush1.bf16.msra.mxu0 %v1131
      %1160 = vmatprep.subr.bf16.mxu0 0
      %1161 = vmatpush1.bf16.msra.mxu0 %v1130
      %1162 = vmatprep.subr.bf16.mxu0 0
      %1163 = vmatpush2.bf16.msra.mxu0 0
      %1164 = vmatprep.subr.bf16.mxu0 0
      %1165 = vmatpush2.bf16.msra.mxu0 0
      %1166 = vmatprep.subr.bf16.mxu0 0
      %1167 = vmatpush2.bf16.msra.mxu0 0
      %1168 = vmatprep.subr.bf16.mxu0 0
      %1169 = vmatpush2.bf16.msra.mxu0 0
      %1170 = vmatprep.subr.bf16.mxu0 0
      %1171 = vmatpush2.bf16.msra.mxu0 0
      %1172 = vmatprep.subr.bf16.mxu0 0
      %1173 = vmatpush2.bf16.msra.mxu0 0
      %1174 = vmatprep.subr.bf16.mxu0 0
      %1175 = vmatpush2.bf16.msra.mxu0 0
      %1176 = vmatprep.subr.bf16.mxu0 0
      %1177 = vmatpush2.bf16.msra.mxu0 0
      %1178 = vmatprep.mubr.bf16.mxu0 0
      %1179 = vmatmul.mubr.bf16.gmra.mxu0 %v1072
      %v1180 = vpop.f32.mrf.mxu0
      %v1181 = vadd.f32 %v1096, %v1180
      %v1182 = vpop.f32.mrf.mxu0
      %v1183 = vpop.f32.mrf.mxu0
      %v1184 = vadd.f32 %v1096, %v1183
      %v1185 = vpop.f32.mrf.mxu0
      %1186 = vmatprep.mubr.bf16.mxu0 0
      %1187 = vmatmul.mubr.bf16.gmra.mxu0 %v1073
      %v1188 = vpop.f32.mrf.mxu0
      %v1189 = vadd.f32 %v1096, %v1188
      %v1190 = vpop.f32.mrf.mxu0
      %v1191 = vpop.f32.mrf.mxu0
      %v1192 = vadd.f32 %v1096, %v1191
      %v1193 = vpop.f32.mrf.mxu0
      %1194 = vmatprep.mubr.bf16.mxu0 0
      %1195 = vmatmul.mubr.bf16.gmra.mxu0 %v1074
      %v1196 = vpop.f32.mrf.mxu0
      %v1197 = vadd.f32 %v1096, %v1196
      %v1198 = vpop.f32.mrf.mxu0
      %v1199 = vpop.f32.mrf.mxu0
      %v1200 = vpop.f32.mrf.mxu0
      %1201 = vdwg.mxu0
      %v1202 = vadd.f32 %v828, %v1181
      %v1203 = vadd.f32 %v829, %v1184
      %v1204 = vadd.f32 %v830, %v1189
      %v1205 = vadd.f32 %v831, %v1192
      %v1206 = vadd.f32 %v832, %v1197
      %1207 = vst [vmem:[%s585] sm:$0xff] %v1202
      %1208 = vst [vmem:[%s585 + $0x8] sm:$0xff] %v1203
      %1209 = vst [vmem:[%s585 + $0x10] sm:$0xff] %v1204
      %1210 = vst [vmem:[%s585 + $0x18] sm:$0xff] %v1205
      %1211 = vst [vmem:[%s585 + $0x20] sm:$0xff] %v1206
      %s1212 = smul.u32 5, %s27
      %p1213 = scmp.lt.s32.totalorder %s1212, 4
      %s1214 = scalar_select %p1213, %s1212, 4
      %s1215 = smul.addr %s1214, 8
      %s1216 = scalar_lea.vmem %s12, %s1215
      // Predicated region
      $region73: #{vit_forward.4} parent=67 // pred_check
        %p1217 = pneg %p360
      $region74: #{vit_forward.4} parent=67 // pred_check_branch
        %1219 = sbr.rel (%p1217) target = $region76
      $region75: #{vit_forward.4} parent=67 // pred_region
        %s1220 = smul.u32 5, %s27
      $region76: #{vit_forward.4} parent=67 // pred_fallthru
        _
      // Predicated region
      $region77: #{vit_forward.4} parent=67 // pred_check
        %p1221 = pneg %p360
      $region78: #{vit_forward.4} parent=67 // pred_check_branch
        %1223 = sbr.rel (%p1221) target = $region80
      $region79: #{vit_forward.4} parent=67 // pred_region
        %s1224 = smul.u32 5, %s27
        %p1225 = scmp.lt.s32.totalorder %s1224, 4
        %s1226 = scalar_select %p1225, %s1224, 4
        %s1227 = smul.addr %s1226, 8
        %s1228 = scalar_lea.vmem %s12, %s1227
      $region80: #{vit_forward.4} parent=67 // pred_fallthru
        _
    $region68: #{vit_forward.4} parent=5 // pred_fallthru
      _
    %p1229 = scmp.le.s32.totalorder 2, %s18
    // Predicated region
    $region81: #{vit_forward.4} parent=5 // pred_check
      %p1230 = pneg %p1229
    $region82: #{vit_forward.4} parent=5 // pred_check_branch
      %1232 = sbr.rel (%p1230) target = $region84
    $region83: #{vit_forward.4} parent=5 // pred_region
      %s1233 = ssub.s32 %s18, 2
    $region84: #{vit_forward.4} parent=5 // pred_fallthru
      _
  $region6: #{vit_forward.4} parent=0 // loop_footer
    %s22 = sadd.s32 1, %s18
  $region7: #{vit_forward.4} parent=0 // loop_footer_branch
    %17 = sbr.rel target = $region3
  $region8: #{vit_forward.4} parent=0 // loop_exit
    _

</llo_original>
